<compile_context>
chip_gen: v5e
topology: v5e:2x2
jax: 0.10.0
libtpu: 0.0.40
codegen_flags: <defaults>
</compile_context>

<pallas_src>
import math

import numpy as np
import jax
import jax.numpy as jnp
from jax.experimental import pallas as pl
from jax.experimental.pallas import tpu as pltpu


def _split3_bf16(v):
    """Split f32 `v` into three bf16 parts whose (ordered) sum is exactly v.

    Uses bit-truncation prefix chunks (8+8+8 mantissa bits), so every partial
    sum is exactly representable in f32 and the MXU products (part * 1.0) are
    exact -> the fan-out below reconstructs x bit-exactly.
    """
    u = pltpu.bitcast(v, jnp.uint32)
    hi = pltpu.bitcast(u & jnp.uint32(0xFFFF0000), jnp.float32)
    r1 = v - hi                      # exact (Sterbenz)
    u1 = pltpu.bitcast(r1, jnp.uint32)
    mid = pltpu.bitcast(u1 & jnp.uint32(0xFFFF0000), jnp.float32)
    lo = r1 - mid                    # exact, <= 8 significant bits
    return (hi.astype(jnp.bfloat16),
            mid.astype(jnp.bfloat16),
            lo.astype(jnp.bfloat16))


def _make_kernel(N, off, use_cov):
    """off = 1 if append_input else 0; per-group lane layout is
    [x (off lanes), sin_0..sin_{N-1}, cos_0..cos_{N-1}]."""

    def fan_out(v_f32, r_bf16):
        # Replicate each of the G lanes of v to its C output lanes (exactly),
        # via the 0/1 replication matrix on the MXU.
        p0, p1, p2 = _split3_bf16(v_f32)
        acc = jnp.dot(p0, r_bf16, preferred_element_type=jnp.float32)
        acc = acc + jnp.dot(p1, r_bf16, preferred_element_type=jnp.float32)
        acc = acc + jnp.dot(p2, r_bf16, preferred_element_type=jnp.float32)
        return acc

    def kernel(*refs):
        if use_cov:
            x_ref, cov_ref, r_ref, freq_ref, cidx_ref, o_ref = refs
        else:
            x_ref, r_ref, freq_ref, cidx_ref, o_ref = refs
            cov_ref = None

        r = r_ref[...]                      # (G, G*C) bf16 0/1 replication matrix
        freq = freq_ref[...]                # (1, G*C) f32 per-lane frequency
        cidx = cidx_ref[...]                # (1, G*C) f32 per-lane position-in-group

        x = x_ref[...].astype(jnp.float32)  # (bm, G)
        x_rep = fan_out(x, r)               # (bm, G*C), bit-exact copy of x per lane

        ang = x_rep * freq                  # == fl(x * f), same as the reference
        s = jnp.sin(ang)
        co = jnp.cos(ang)

        # sin lanes are cidx in [off, off+N), cos lanes [off+N, off+2N).
        out = jnp.where(cidx < float(off + N), s, co)
        if off:
            out = jnp.where(cidx < float(off), x_rep, out)
        if use_cov:
            cov_rep = fan_out(cov_ref[...].astype(jnp.float32), r)
            out = out * cov_rep             # cov scales the appended x too (as in ref)

        o_ref[...] = out.astype(o_ref.dtype)   # single dense full-tile store

    return kernel


def harmonic_embedding(
    x,
    diag_cov=None,
    *,
    n_harmonic_functions: int = 6,
    omega_0: float = 1.0,
    logspace: bool = True,
    append_input: bool = True,
    out_block_bytes: int = 1_250_000,
    out_dtype=None,
):
    x = jnp.asarray(x)
    if x.dtype != jnp.float32:
        x = x.astype(jnp.float32)
    batch_shape = x.shape[:-1]
    D = int(x.shape[-1])
    P = int(math.prod(x.shape))          # total scalars = prod(batch) * D
    N = int(n_harmonic_functions)
    off = 1 if append_input else 0
    C = 2 * N + off
    out_dtype = jnp.float32 if out_dtype is None else out_dtype

    # Frequencies as compile-time constants (no per-step DMA of a tiny buffer).
    if logspace:
        freqs = [float(omega_0) * (2.0 ** i) for i in range(N)]
    else:
        # torch.linspace(1.0, N, N) == [1, 2, ..., N]
        freqs = [float(omega_0) * float(i + 1) for i in range(N)]

    use_cov = diag_cov is not None

    # ---- lane packing: G scalars per packed row (G = largest divisor of P <= 128)
    G = 1
    for g in range(min(P, 128), 0, -1):
        if P % g == 0:
            G = g
            break
    Rp = P // G
    L = G * C

    xf = x.reshape(Rp, G)                               # free row-major reshape
    inputs = [xf]
    if use_cov:
        cf = jnp.asarray(diag_cov).astype(jnp.float32).reshape(Rp, G)
        inputs.append(cf)

    # 0/1 replication matrix (G, G*C): column g*C+c reads input lane g.  bf16-exact.
    rep = np.kron(np.eye(G, dtype=np.float32), np.ones((1, C), dtype=np.float32))
    rep = jnp.asarray(rep, dtype=jnp.bfloat16)

    # Per-lane frequency and position-in-group vectors (tiny, fetched once).
    freq_per_c = np.zeros((C,), np.float32)
    if off:
        freq_per_c[0] = 1.0                              # value unused (overridden by x)
    freq_per_c[off:off + N] = freqs
    freq_per_c[off + N:off + 2 * N] = freqs
    freq_vec = jnp.asarray(np.tile(freq_per_c, G).reshape(1, L))
    cidx_vec = jnp.asarray(np.tile(np.arange(C, dtype=np.float32), G).reshape(1, L))
    inputs += [rep, freq_vec, cidx_vec]

    # Packed-row tile size: target ~out_block_bytes of f32 output per grid step.
    # Total VMEM (double-buffered + in-kernel temps) ~= 8 * tile + ~1 MB, kept
    # under the v5e 16 MiB scoped default (see header comment).
    bm = max(8, (out_block_bytes // (L * 4)) // 8 * 8)
    bm = min(bm, Rp)
    grid = (pl.cdiv(Rp, bm),)

    in_specs = [pl.BlockSpec((bm, G), lambda i: (i, 0))]
    if use_cov:
        in_specs.append(pl.BlockSpec((bm, G), lambda i: (i, 0)))
    in_specs += [
        pl.BlockSpec((G, L), lambda i: (0, 0)),          # replication matrix (resident)
        pl.BlockSpec((1, L), lambda i: (0, 0)),          # freq_vec
        pl.BlockSpec((1, L), lambda i: (0, 0)),          # cidx_vec
    ]
    out_spec = pl.BlockSpec((bm, L), lambda i: (i, 0))

    kernel = _make_kernel(N, off, use_cov)

    out = pl.pallas_call(
        kernel,
        out_shape=jax.ShapeDtypeStruct((Rp, L), out_dtype),
        grid=grid,
        in_specs=in_specs,
        out_specs=out_spec,
        compiler_params=pltpu.CompilerParams(
            dimension_semantics=("parallel",),
        ),
    )(*inputs)

    # Free row-major reshape back to the module's output shape.
    return out.reshape(*batch_shape, D, C)


def _reference(x, diag_cov, *, n_harmonic_functions=6, omega_0=1.0,
               logspace=True, append_input=True):
    """Pure-JAX reference mirroring the (fixed) PyTorch forward."""
    N = n_harmonic_functions
    if logspace:
        freqs = omega_0 * (2.0 ** jnp.arange(N, dtype=jnp.float32))
    else:
        freqs = omega_0 * jnp.linspace(1.0, float(N), N, dtype=jnp.float32)
    angles = x[..., None] * freqs.reshape(1, N)
    emb = jnp.concatenate([jnp.sin(angles), jnp.cos(angles)], axis=-1)
    if append_input:
        emb = jnp.concatenate([x[..., None], emb], axis=-1)
    if diag_cov is not None:
        emb = emb * diag_cov[..., None]
    return emb


if __name__ == "__main__":
    key = jax.random.PRNGKey(0)
    k1, k2, k3, k4, k5 = jax.random.split(key, 5)

    # Small module-consistent shapes: 2 "rays" x 8 points x 3-D coords.
    x = jax.random.normal(k1, (2, 8, 3), dtype=jnp.float32)
    diag_cov = jax.random.uniform(k2, (2, 8, 3), dtype=jnp.float32)

    out = jax.block_until_ready(harmonic_embedding(x, diag_cov))
    ref = _reference(x, diag_cov)
    assert out.shape == (2, 8, 3, 13), out.shape
    assert jnp.allclose(out, ref, atol=1e-5, rtol=1e-5)

    # no-cov / no-append / linspace path
    out2 = jax.block_until_ready(
        harmonic_embedding(x, None, append_input=False, logspace=False))
    ref2 = _reference(x, None, append_input=False, logspace=False)
    assert out2.shape == (2, 8, 3, 12), out2.shape
    assert jnp.allclose(out2, ref2, atol=1e-5, rtol=1e-5)

    # Odd scalar count (P=105): packing falls back to a single 105-wide group.
    x3 = jax.random.normal(k3, (5, 7, 3), dtype=jnp.float32)
    out3 = jax.block_until_ready(harmonic_embedding(x3, None))
    ref3 = _reference(x3, None)
    assert out3.shape == (5, 7, 3, 13), out3.shape
    assert jnp.allclose(out3, ref3, atol=1e-5, rtol=1e-5)

    # Multi-step grid with a clipped last block (P=3120 -> G=120, 26 packed rows, bm=8).
    x4 = jax.random.normal(k4, (2, 520, 3), dtype=jnp.float32)
    cov4 = jax.random.uniform(k5, (2, 520, 3), dtype=jnp.float32)
    out4 = jax.block_until_ready(harmonic_embedding(x4, cov4, out_block_bytes=60_000))
    ref4 = _reference(x4, cov4)
    assert out4.shape == (2, 520, 3, 13), out4.shape
    assert jnp.allclose(out4, ref4, atol=1e-5, rtol=1e-5)

    # bf16 output (recommended on v5e/v6e when the consumer tolerates it).
    out_bf = jax.block_until_ready(
        harmonic_embedding(x, diag_cov, out_dtype=jnp.bfloat16))
    assert out_bf.dtype == jnp.bfloat16 and out_bf.shape == (2, 8, 3, 13)
    assert jnp.allclose(out_bf.astype(jnp.float32), ref, atol=3e-2, rtol=3e-2)

    print("KERNEL_OK")
</pallas_src>

<mosaic_0001>
module attributes {stable_mosaic.version = 11 : i64} {
  func.func @kernel(%arg0: i32, %arg1: memref<1x48xf32, #tpu.memory_space<vmem>>, %arg2: memref<1x48xf32, #tpu.memory_space<vmem>>, %arg3: memref<48x624xbf16, #tpu.memory_space<vmem>>, %arg4: memref<1x624xf32, #tpu.memory_space<vmem>>, %arg5: memref<1x624xf32, #tpu.memory_space<vmem>>, %arg6: memref<1x624xf32, #tpu.memory_space<vmem>>) attributes {dimension_semantics = [#tpu.dimension_semantics<parallel>], iteration_bounds = array<i64: 1>, scalar_prefetch = 0 : i64, scratch_operands = 0 : i64, tpu.core_type = #tpu.core_type<tc>, window_params = [{transform_indices = @transform_0, window_bounds = array<i64: 1, 48>}, {transform_indices = @transform_1, window_bounds = array<i64: 1, 48>}, {pipeline_mode = #tpu.pipeline_mode<synchronous>, transform_indices = @transform_2, window_bounds = array<i64: 48, 624>}, {pipeline_mode = #tpu.pipeline_mode<synchronous>, transform_indices = @transform_3, window_bounds = array<i64: 1, 624>}, {pipeline_mode = #tpu.pipeline_mode<synchronous>, transform_indices = @transform_4, window_bounds = array<i64: 1, 624>}, {transform_indices = @transform_5, window_bounds = array<i64: 1, 624>}]} {
    %c0 = arith.constant 0 : index
    %c0_0 = arith.constant 0 : index
    %0 = vector.load %arg3[%c0, %c0_0] : memref<48x624xbf16, #tpu.memory_space<vmem>>, vector<48x624xbf16>
    %c0_1 = arith.constant 0 : index
    %c0_2 = arith.constant 0 : index
    %1 = vector.load %arg4[%c0_1, %c0_2] : memref<1x624xf32, #tpu.memory_space<vmem>>, vector<1x624xf32>
    %c0_3 = arith.constant 0 : index
    %c0_4 = arith.constant 0 : index
    %2 = vector.load %arg5[%c0_3, %c0_4] : memref<1x624xf32, #tpu.memory_space<vmem>>, vector<1x624xf32>
    %c0_5 = arith.constant 0 : index
    %c0_6 = arith.constant 0 : index
    %3 = vector.load %arg1[%c0_5, %c0_6] : memref<1x48xf32, #tpu.memory_space<vmem>>, vector<1x48xf32>
    %4 = tpu.bitcast %3 : vector<1x48xf32> -> vector<1x48xi32>
    %c-65536_i32 = arith.constant -65536 : i32
    %5 = vector.broadcast %c-65536_i32 : i32 to vector<1x48xi32>
    %6 = arith.andi %4, %5 : vector<1x48xi32>
    %7 = tpu.bitcast %6 : vector<1x48xi32> -> vector<1x48xf32>
    %8 = arith.subf %3, %7 : vector<1x48xf32>
    %9 = tpu.bitcast %8 : vector<1x48xf32> -> vector<1x48xi32>
    %c-65536_i32_7 = arith.constant -65536 : i32
    %10 = vector.broadcast %c-65536_i32_7 : i32 to vector<1x48xi32>
    %11 = arith.andi %9, %10 : vector<1x48xi32>
    %12 = tpu.bitcast %11 : vector<1x48xi32> -> vector<1x48xf32>
    %13 = arith.subf %8, %12 : vector<1x48xf32>
    %14 = arith.truncf %7 : vector<1x48xf32> to vector<1x48xbf16>
    %15 = arith.truncf %12 : vector<1x48xf32> to vector<1x48xbf16>
    %16 = arith.truncf %13 : vector<1x48xf32> to vector<1x48xbf16>
    %cst = arith.constant dense<0.000000e+00> : vector<1x624xf32>
    %17 = tpu.matmul %14, %0, %cst {dimension_numbers = #tpu.dot_dimension_numbers<[1], [0], [0], [1], [0, 0, 1, 1], [], []>} : vector<1x48xbf16>, vector<48x624xbf16>, vector<1x624xf32> -> vector<1x624xf32>
    %cst_8 = arith.constant dense<0.000000e+00> : vector<1x624xf32>
    %18 = tpu.matmul %15, %0, %cst_8 {dimension_numbers = #tpu.dot_dimension_numbers<[1], [0], [0], [1], [0, 0, 1, 1], [], []>} : vector<1x48xbf16>, vector<48x624xbf16>, vector<1x624xf32> -> vector<1x624xf32>
    %19 = arith.addf %17, %18 : vector<1x624xf32>
    %cst_9 = arith.constant dense<0.000000e+00> : vector<1x624xf32>
    %20 = tpu.matmul %16, %0, %cst_9 {dimension_numbers = #tpu.dot_dimension_numbers<[1], [0], [0], [1], [0, 0, 1, 1], [], []>} : vector<1x48xbf16>, vector<48x624xbf16>, vector<1x624xf32> -> vector<1x624xf32>
    %21 = arith.addf %19, %20 : vector<1x624xf32>
    %22 = arith.mulf %21, %1 : vector<1x624xf32>
    %23 = math.sin %22 : vector<1x624xf32>
    %24 = math.cos %22 : vector<1x624xf32>
    %cst_10 = arith.constant 7.000000e+00 : f32
    %25 = vector.broadcast %cst_10 : f32 to vector<1x624xf32>
    %26 = arith.cmpf olt, %2, %25 : vector<1x624xf32>
    %27 = arith.select %26, %23, %24 : vector<1x624xi1>, vector<1x624xf32>
    %cst_11 = arith.constant 1.000000e+00 : f32
    %28 = vector.broadcast %cst_11 : f32 to vector<1x624xf32>
    %29 = arith.cmpf olt, %2, %28 : vector<1x624xf32>
    %30 = arith.select %29, %21, %27 : vector<1x624xi1>, vector<1x624xf32>
    %c0_12 = arith.constant 0 : index
    %c0_13 = arith.constant 0 : index
    %31 = vector.load %arg2[%c0_12, %c0_13] : memref<1x48xf32, #tpu.memory_space<vmem>>, vector<1x48xf32>
    %32 = tpu.bitcast %31 : vector<1x48xf32> -> vector<1x48xi32>
    %c-65536_i32_14 = arith.constant -65536 : i32
    %33 = vector.broadcast %c-65536_i32_14 : i32 to vector<1x48xi32>
    %34 = arith.andi %32, %33 : vector<1x48xi32>
    %35 = tpu.bitcast %34 : vector<1x48xi32> -> vector<1x48xf32>
    %36 = arith.subf %31, %35 : vector<1x48xf32>
    %37 = tpu.bitcast %36 : vector<1x48xf32> -> vector<1x48xi32>
    %c-65536_i32_15 = arith.constant -65536 : i32
    %38 = vector.broadcast %c-65536_i32_15 : i32 to vector<1x48xi32>
    %39 = arith.andi %37, %38 : vector<1x48xi32>
    %40 = tpu.bitcast %39 : vector<1x48xi32> -> vector<1x48xf32>
    %41 = arith.subf %36, %40 : vector<1x48xf32>
    %42 = arith.truncf %35 : vector<1x48xf32> to vector<1x48xbf16>
    %43 = arith.truncf %40 : vector<1x48xf32> to vector<1x48xbf16>
    %44 = arith.truncf %41 : vector<1x48xf32> to vector<1x48xbf16>
    %cst_16 = arith.constant dense<0.000000e+00> : vector<1x624xf32>
    %45 = tpu.matmul %42, %0, %cst_16 {dimension_numbers = #tpu.dot_dimension_numbers<[1], [0], [0], [1], [0, 0, 1, 1], [], []>} : vector<1x48xbf16>, vector<48x624xbf16>, vector<1x624xf32> -> vector<1x624xf32>
    %cst_17 = arith.constant dense<0.000000e+00> : vector<1x624xf32>
    %46 = tpu.matmul %43, %0, %cst_17 {dimension_numbers = #tpu.dot_dimension_numbers<[1], [0], [0], [1], [0, 0, 1, 1], [], []>} : vector<1x48xbf16>, vector<48x624xbf16>, vector<1x624xf32> -> vector<1x624xf32>
    %47 = arith.addf %45, %46 : vector<1x624xf32>
    %cst_18 = arith.constant dense<0.000000e+00> : vector<1x624xf32>
    %48 = tpu.matmul %44, %0, %cst_18 {dimension_numbers = #tpu.dot_dimension_numbers<[1], [0], [0], [1], [0, 0, 1, 1], [], []>} : vector<1x48xbf16>, vector<48x624xbf16>, vector<1x624xf32> -> vector<1x624xf32>
    %49 = arith.addf %47, %48 : vector<1x624xf32>
    %50 = arith.mulf %30, %49 : vector<1x624xf32>
    %c0_19 = arith.constant 0 : index
    %c0_20 = arith.constant 0 : index
    %51 = vector.load %arg6[%c0_19, %c0_20] : memref<1x624xf32, #tpu.memory_space<vmem>>, vector<1x624xf32>
    tpu.vector_store %arg6[%c0_19, %c0_20], %50 {strides = array<i32>} : memref<1x624xf32, #tpu.memory_space<vmem>>, vector<1x624xf32>,
    return
  }
  func.func @transform_0(%arg0: i32) -> (i32, i32) {
    %c0_i32 = arith.constant 0 : i32
    %c0_i32_0 = arith.constant 0 : i32
    return %arg0, %c0_i32 : i32, i32
  }
  func.func @transform_1(%arg0: i32) -> (i32, i32) {
    %c0_i32 = arith.constant 0 : i32
    %c0_i32_0 = arith.constant 0 : i32
    return %arg0, %c0_i32 : i32, i32
  }
  func.func @transform_2(%arg0: i32) -> (i32, i32) {
    %c0_i32 = arith.constant 0 : i32
    %c0_i32_0 = arith.constant 0 : i32
    %c0_i32_1 = arith.constant 0 : i32
    return %c0_i32, %c0_i32_0 : i32, i32
  }
  func.func @transform_3(%arg0: i32) -> (i32, i32) {
    %c0_i32 = arith.constant 0 : i32
    %c0_i32_0 = arith.constant 0 : i32
    %c0_i32_1 = arith.constant 0 : i32
    return %c0_i32, %c0_i32_0 : i32, i32
  }
  func.func @transform_4(%arg0: i32) -> (i32, i32) {
    %c0_i32 = arith.constant 0 : i32
    %c0_i32_0 = arith.constant 0 : i32
    %c0_i32_1 = arith.constant 0 : i32
    return %c0_i32, %c0_i32_0 : i32, i32
  }
  func.func @transform_5(%arg0: i32) -> (i32, i32) {
    %c0_i32 = arith.constant 0 : i32
    %c0_i32_0 = arith.constant 0 : i32
    return %arg0, %c0_i32 : i32, i32
  }
}

</mosaic_0001>

<llo_original>
// kernel: tpu_custom_call.1
$region0: #{tpu_custom_call.1}
  #allocation0 [shape = 'u32[]', space=smem, size = 0x4, offset = 0x4, fixed_abs, tag = 'smem constant byte address 0x4 - core index']
  #allocation1 [shape = 'u32[72,128]{1,0:T(1,128)}', space=vmem, size = 0x9000, scoped, tag = 'internal scratch']
  %s0 = inlined_call_operand.hbm [shape: f32[1,48], index: 0, kind: input, shape index: {}]
  %s1 = inlined_call_operand.hbm [shape: f32[1,48], index: 1, kind: input, shape index: {}]
  %s2 = inlined_call_operand.hbm [shape: bf16[48,624], index: 2, kind: input, shape index: {}]
  %s3 = inlined_call_operand.hbm [shape: f32[1,624], index: 3, kind: input, shape index: {}]
  %s4 = inlined_call_operand.hbm [shape: f32[1,624], index: 4, kind: input, shape index: {}]
  %s5 = inlined_call_operand.hbm [shape: f32[1,624], index: 5, kind: output, shape index: {}]
  %s6 = sld [smem:[#allocation0]]
  $region50: #{tpu_custom_call.1} parent=0
    _
  %s8 = ssub.s32 1, %s6
  %s9 = scalar_select 0, %s8, %s6
  $region1: #{tpu_custom_call.1} parent=0
    #allocation2 [shape = 'u8[512]{0}', space=vmem, size = 0x400, scoped, tag = 'input window, operand 0, single buffered']
    #allocation3 [shape = 's32[1]{0}', space=sflag, size = 0x4, scoped, tag = 'scoped memory for tpu_custom_call.1']
    #allocation4 [shape = 's32[1]{0}', space=sflag, size = 0x4, scoped, tag = 'scoped memory for tpu_custom_call.1']
    #allocation5 [shape = 'u8[512]{0}', space=vmem, size = 0x400, scoped, tag = 'input window, operand 1, single buffered']
    #allocation6 [shape = 's32[1]{0}', space=sflag, size = 0x4, scoped, tag = 'scoped memory for tpu_custom_call.1']
    #allocation7 [shape = 'u8[61440]{0}', space=vmem, size = 0xf000, scoped, tag = 'input window, operand 2, single buffered']
    #allocation8 [shape = 'u8[2560]{0}', space=vmem, size = 0xc00, scoped, tag = 'input window, operand 3, single buffered']
    #allocation9 [shape = 's32[1]{0}', space=sflag, size = 0x4, scoped, tag = 'scoped memory for tpu_custom_call.1']
    #allocation10 [shape = 'u8[2560]{0}', space=vmem, size = 0xc00, scoped, tag = 'input window, operand 4, single buffered']
    #allocation11 [shape = 'u8[2560]{0}', space=vmem, size = 0xc00, scoped, tag = 'output window, operand 0, single buffered']
    %10 = vsyncpa [#allocation3], 0
    %11 = vsyncpa [#allocation6], 0
    %12 = vsyncpa [#allocation9], 0
    %13 = vsyncpa [#allocation4], 0
    // Predicated region
    $region2: #{tpu_custom_call.1} parent=1 // pred_check
      _
    $region3: #{tpu_custom_call.1} parent=1 // pred_check_branch
      %15 = sbr.rel (0) target = $region5
    $region4: #{tpu_custom_call.1} parent=1 // pred_region
      %17 = vsyncadd [#allocation3], 0
      %s19 = sshll.u32 %s0, 4
      %s20 = int_to_ptr.hbm [resolvable:$true] %s19
      %s21 = sshll.u32 [#allocation2], 4
      %s22 = int_to_ptr.vmem [resolvable:$true] %s21
      %24 = dma.hbm_to_vmem [thread:$0]  %s20, 16, %s22, [#allocation3]
    $region5: #{tpu_custom_call.1} parent=1 // pred_fallthru
      _
    // Predicated region
    $region6: #{tpu_custom_call.1} parent=1 // pred_check
      _
    $region7: #{tpu_custom_call.1} parent=1 // pred_check_branch
      %26 = sbr.rel (0) target = $region9
    $region8: #{tpu_custom_call.1} parent=1 // pred_region
      %28 = vsyncadd [#allocation6], 0
      %s30 = sshll.u32 %s1, 4
      %s31 = int_to_ptr.hbm [resolvable:$true] %s30
      %s32 = sshll.u32 [#allocation5], 4
      %s33 = int_to_ptr.vmem [resolvable:$true] %s32
      %35 = dma.hbm_to_vmem [thread:$0]  %s31, 16, %s33, [#allocation6]
    $region9: #{tpu_custom_call.1} parent=1 // pred_fallthru
      _
    // Predicated region
    $region10: #{tpu_custom_call.1} parent=1 // pred_check
      _
    $region11: #{tpu_custom_call.1} parent=1 // pred_check_branch
      %37 = sbr.rel (0) target = $region13
    $region12: #{tpu_custom_call.1} parent=1 // pred_region
      %39 = vsyncadd [#allocation6], 0
      %s40 = sshll.u32 %s2, 4
      %s41 = int_to_ptr.hbm [resolvable:$true] %s40
      %s42 = sshll.u32 [#allocation7], 4
      %s43 = int_to_ptr.vmem [resolvable:$true] %s42
      %48 = dma.hbm_to_vmem [thread:$0]  %s41, 1920, %s43, [#allocation6], 320, 320, 20
    $region13: #{tpu_custom_call.1} parent=1 // pred_fallthru
      _
    // Predicated region
    $region14: #{tpu_custom_call.1} parent=1 // pred_check
      _
    $region15: #{tpu_custom_call.1} parent=1 // pred_check_branch
      %50 = sbr.rel (0) target = $region17
    $region16: #{tpu_custom_call.1} parent=1 // pred_region
      %52 = vsyncadd [#allocation9], 0
      %s54 = sshll.u32 %s3, 4
      %s55 = int_to_ptr.hbm [resolvable:$true] %s54
      %s56 = sshll.u32 [#allocation8], 4
      %s57 = int_to_ptr.vmem [resolvable:$true] %s56
      %59 = dma.hbm_to_vmem [thread:$0]  %s55, 80, %s57, [#allocation9]
    $region17: #{tpu_custom_call.1} parent=1 // pred_fallthru
      _
    // Predicated region
    $region18: #{tpu_custom_call.1} parent=1 // pred_check
      _
    $region19: #{tpu_custom_call.1} parent=1 // pred_check_branch
      %61 = sbr.rel (0) target = $region21
    $region20: #{tpu_custom_call.1} parent=1 // pred_region
      %63 = vsyncadd [#allocation9], 0
      %s65 = sshll.u32 %s4, 4
      %s66 = int_to_ptr.hbm [resolvable:$true] %s65
      %s67 = sshll.u32 [#allocation10], 4
      %s68 = int_to_ptr.vmem [resolvable:$true] %s67
      %70 = dma.hbm_to_vmem [thread:$0]  %s66, 80, %s68, [#allocation9]
    $region21: #{tpu_custom_call.1} parent=1 // pred_fallthru
      _
    // Predicated region
    $region22: #{tpu_custom_call.1} parent=1 // pred_check
      _
    $region23: #{tpu_custom_call.1} parent=1 // pred_check_branch
      %72 = sbr.rel (0) target = $region25
    $region24: #{tpu_custom_call.1} parent=1 // pred_region
      %74 = dma.done [#allocation3], 16
    $region25: #{tpu_custom_call.1} parent=1 // pred_fallthru
      _
    // Predicated region
    $region26: #{tpu_custom_call.1} parent=1 // pred_check
      _
    $region27: #{tpu_custom_call.1} parent=1 // pred_check_branch
      %76 = sbr.rel (0) target = $region29
    $region28: #{tpu_custom_call.1} parent=1 // pred_region
      %78 = dma.done [#allocation6], 16
    $region29: #{tpu_custom_call.1} parent=1 // pred_fallthru
      _
    // Predicated region
    $region30: #{tpu_custom_call.1} parent=1 // pred_check
      _
    $region31: #{tpu_custom_call.1} parent=1 // pred_check_branch
      %80 = sbr.rel (0) target = $region33
    $region32: #{tpu_custom_call.1} parent=1 // pred_region
      %82 = dma.done [#allocation6], 1920
    $region33: #{tpu_custom_call.1} parent=1 // pred_fallthru
      _
    // Predicated region
    $region34: #{tpu_custom_call.1} parent=1 // pred_check
      _
    $region35: #{tpu_custom_call.1} parent=1 // pred_check_branch
      %84 = sbr.rel (0) target = $region37
    $region36: #{tpu_custom_call.1} parent=1 // pred_region
      %86 = dma.done [#allocation9], 80
    $region37: #{tpu_custom_call.1} parent=1 // pred_fallthru
      _
    // Predicated region
    $region38: #{tpu_custom_call.1} parent=1 // pred_check
      _
    $region39: #{tpu_custom_call.1} parent=1 // pred_check_branch
      %88 = sbr.rel (0) target = $region41
    $region40: #{tpu_custom_call.1} parent=1 // pred_region
      %90 = dma.done [#allocation9], 80
    $region41: #{tpu_custom_call.1} parent=1 // pred_fallthru
      _
    %v92 = vld [vmem:[#allocation7] sm:$0xff]
    %v93 = vld [vmem:[#allocation7 + $0x8] sm:$0xff]
    %v94 = vld [vmem:[#allocation7 + $0x10] sm:$0xf]
    %v95 = vld [vmem:[#allocation7 + $0x14] sm:$0xff]
    %v96 = vld [vmem:[#allocation7 + $0x1c] sm:$0xff]
    %v97 = vld [vmem:[#allocation7 + $0x24] sm:$0xf]
    %v98 = vld [vmem:[#allocation7 + $0x28] sm:$0xff]
    %v99 = vld [vmem:[#allocation7 + $0x30] sm:$0xff]
    %v100 = vld [vmem:[#allocation7 + $0x38] sm:$0xf]
    %v101 = vld [vmem:[#allocation7 + $0x3c] sm:$0xff]
    %v102 = vld [vmem:[#allocation7 + $0x44] sm:$0xff]
    %v103 = vld [vmem:[#allocation7 + $0x4c] sm:$0xf]
    %v104 = vld [vmem:[#allocation7 + $0x50] sm:$0xff]
    %v105 = vld [vmem:[#allocation7 + $0x58] sm:$0xff]
    %v106 = vld [vmem:[#allocation7 + $0x60] sm:$0xf]
    %v107 = vld [vmem:[#allocation7 + $0x64] sm:$0xff]
    %v108 = vld [vmem:[#allocation7 + $0x6c] sm:$0xff]
    %v109 = vld [vmem:[#allocation7 + $0x74] sm:$0xf]
    %v110 = vld [vmem:[#allocation8] sm:$0x1f]
    %v111 = vld [vmem:[#allocation10] sm:$0x1f]
    %v112 = vld [vmem:[#allocation2] sm:$0x1]
    %v114 = vand.u32 %v112, 4294901760
    %v116 = vsub.f32 %v112, %v114
    %v118 = vand.u32 %v116, 4294901760
    %v120 = vsub.f32 %v116, %v118
    %v121 = vpack.c.bf16 %v114, %v114
    %v122 = vpack.c.bf16 %v118, %v118
    %v123 = vpack.c.bf16 %v120, %v120
    %v142 = vunpack.c.l.b16 %v92
    %v143 = vunpack.c.h.b16 %v92
    %v144 = vunpack.c.l.b16 %v93
    %v145 = vunpack.c.h.b16 %v93
    %v146 = vunpack.c.l.b16 %v94
    %v147 = vunpack.c.l.b16 %v95
    %v148 = vunpack.c.h.b16 %v95
    %v149 = vunpack.c.l.b16 %v96
    %v150 = vunpack.c.h.b16 %v96
    %v151 = vunpack.c.l.b16 %v97
    %v152 = vunpack.c.l.b16 %v98
    %v153 = vunpack.c.h.b16 %v98
    %v154 = vunpack.c.l.b16 %v99
    %v155 = vunpack.c.h.b16 %v99
    %v156 = vunpack.c.l.b16 %v100
    %v157 = vunpack.c.l.b16 %v101
    %v158 = vunpack.c.h.b16 %v101
    %v159 = vunpack.c.l.b16 %v102
    %v160 = vunpack.c.h.b16 %v102
    %v161 = vunpack.c.l.b16 %v103
    %v162 = vunpack.c.l.b16 %v104
    %v163 = vunpack.c.h.b16 %v104
    %v164 = vunpack.c.l.b16 %v105
    %v165 = vunpack.c.h.b16 %v105
    %v166 = vunpack.c.l.b16 %v106
    %v167 = vunpack.c.l.b16 %v107
    %v168 = vunpack.c.h.b16 %v107
    %v169 = vunpack.c.l.b16 %v108
    %v170 = vunpack.c.h.b16 %v108
    %v171 = vunpack.c.l.b16 %v109
    %v172 = vpack.c.b16 %v147, %v142
    %v173 = vpack.c.b16 %v148, %v143
    %v174 = vpack.c.b16 %v149, %v144
    %v175 = vpack.c.b16 %v150, %v145
    %v176 = vpack.c.b16 %v151, %v146
    %v177 = vpack.c.b16 %v157, %v152
    %v178 = vpack.c.b16 %v158, %v153
    %v179 = vpack.c.b16 %v159, %v154
    %v180 = vpack.c.b16 %v160, %v155
    %v181 = vpack.c.b16 %v161, %v156
    %v182 = vpack.c.b16 %v167, %v162
    %v183 = vpack.c.b16 %v168, %v163
    %v184 = vpack.c.b16 %v169, %v164
    %v185 = vpack.c.b16 %v170, %v165
    %v186 = vpack.c.b16 %v171, %v166
    %vm202 = vcmask 392192
    %v204 = vsel %vm202, %v122, 0
    %206 = vmatpush.bf16.msra.mxu0 0
    %207 = vmatpush.bf16.msra.mxu0 0
    %208 = vmatpush.bf16.msra.mxu0 0
    %209 = vmatpush.bf16.msra.mxu0 0
    %210 = vmatpush.bf16.msra.mxu0 0
    %211 = vmatpush.bf16.msra.mxu0 %v182
    %212 = vmatpush.bf16.msra.mxu0 %v177
    %213 = vmatpush.bf16.msra.mxu0 %v172
    %214 = vmatmul.bf16.gmra.mxu0 %v204
    %v215 = vpop.f32.mrf.mxu0
    %v216 = vadd.f32 0.0, %v215
    %v217 = vpop.f32.mrf.mxu0
    %218 = vdwg.mxu0
    %219 = vmatpush.bf16.msra.mxu0 0
    %220 = vmatpush.bf16.msra.mxu0 0
    %221 = vmatpush.bf16.msra.mxu0 0
    %222 = vmatpush.bf16.msra.mxu0 0
    %223 = vmatpush.bf16.msra.mxu0 0
    %224 = vmatpush.bf16.msra.mxu0 %v183
    %225 = vmatpush.bf16.msra.mxu0 %v178
    %226 = vmatpush.bf16.msra.mxu0 %v173
    %227 = vmatmul.bf16.gmra.mxu0 %v204
    %v228 = vpop.f32.mrf.mxu0
    %v229 = vadd.f32 0.0, %v228
    %v230 = vpop.f32.mrf.mxu0
    %231 = vdwg.mxu0
    %232 = vmatpush.bf16.msra.mxu0 0
    %233 = vmatpush.bf16.msra.mxu0 0
    %234 = vmatpush.bf16.msra.mxu0 0
    %235 = vmatpush.bf16.msra.mxu0 0
    %236 = vmatpush.bf16.msra.mxu0 0
    %237 = vmatpush.bf16.msra.mxu0 %v184
    %238 = vmatpush.bf16.msra.mxu0 %v179
    %239 = vmatpush.bf16.msra.mxu0 %v174
    %240 = vmatmul.bf16.gmra.mxu0 %v204
    %v241 = vpop.f32.mrf.mxu0
    %v242 = vadd.f32 0.0, %v241
    %v243 = vpop.f32.mrf.mxu0
    %244 = vdwg.mxu0
    %245 = vmatpush.bf16.msra.mxu0 0
    %246 = vmatpush.bf16.msra.mxu0 0
    %247 = vmatpush.bf16.msra.mxu0 0
    %248 = vmatpush.bf16.msra.mxu0 0
    %249 = vmatpush.bf16.msra.mxu0 0
    %250 = vmatpush.bf16.msra.mxu0 %v185
    %251 = vmatpush.bf16.msra.mxu0 %v180
    %252 = vmatpush.bf16.msra.mxu0 %v175
    %253 = vmatmul.bf16.gmra.mxu0 %v204
    %v254 = vpop.f32.mrf.mxu0
    %v255 = vadd.f32 0.0, %v254
    %v256 = vpop.f32.mrf.mxu0
    %257 = vdwg.mxu0
    %258 = vmatpush.bf16.msra.mxu0 0
    %259 = vmatpush.bf16.msra.mxu0 0
    %260 = vmatpush.bf16.msra.mxu0 0
    %261 = vmatpush.bf16.msra.mxu0 0
    %262 = vmatpush.bf16.msra.mxu0 0
    %263 = vmatpush.bf16.msra.mxu0 %v186
    %264 = vmatpush.bf16.msra.mxu0 %v181
    %265 = vmatpush.bf16.msra.mxu0 %v176
    %266 = vmatmul.bf16.gmra.mxu0 %v204
    %v267 = vpop.f32.mrf.mxu0
    %v268 = vadd.f32 0.0, %v267
    %v269 = vpop.f32.mrf.mxu0
    %270 = vdwg.mxu0
    %v272 = vsel %vm202, %v121, 0
    %274 = vmatpush.bf16.msra.mxu0 0
    %275 = vmatpush.bf16.msra.mxu0 0
    %276 = vmatpush.bf16.msra.mxu0 0
    %277 = vmatpush.bf16.msra.mxu0 0
    %278 = vmatpush.bf16.msra.mxu0 0
    %279 = vmatpush.bf16.msra.mxu0 %v182
    %280 = vmatpush.bf16.msra.mxu0 %v177
    %281 = vmatpush.bf16.msra.mxu0 %v172
    %282 = vmatmul.bf16.gmra.mxu0 %v272
    %v283 = vpop.f32.mrf.mxu0
    %v284 = vadd.f32 %v216, %v283
    %v285 = vpop.f32.mrf.mxu0
    %286 = vdwg.mxu0
    %287 = vmatpush.bf16.msra.mxu0 0
    %288 = vmatpush.bf16.msra.mxu0 0
    %289 = vmatpush.bf16.msra.mxu0 0
    %290 = vmatpush.bf16.msra.mxu0 0
    %291 = vmatpush.bf16.msra.mxu0 0
    %292 = vmatpush.bf16.msra.mxu0 %v183
    %293 = vmatpush.bf16.msra.mxu0 %v178
    %294 = vmatpush.bf16.msra.mxu0 %v173
    %295 = vmatmul.bf16.gmra.mxu0 %v272
    %v296 = vpop.f32.mrf.mxu0
    %v297 = vadd.f32 %v229, %v296
    %v298 = vpop.f32.mrf.mxu0
    %299 = vdwg.mxu0
    %300 = vmatpush.bf16.msra.mxu0 0
    %301 = vmatpush.bf16.msra.mxu0 0
    %302 = vmatpush.bf16.msra.mxu0 0
    %303 = vmatpush.bf16.msra.mxu0 0
    %304 = vmatpush.bf16.msra.mxu0 0
    %305 = vmatpush.bf16.msra.mxu0 %v184
    %306 = vmatpush.bf16.msra.mxu0 %v179
    %307 = vmatpush.bf16.msra.mxu0 %v174
    %308 = vmatmul.bf16.gmra.mxu0 %v272
    %v309 = vpop.f32.mrf.mxu0
    %v310 = vadd.f32 %v242, %v309
    %v311 = vpop.f32.mrf.mxu0
    %312 = vdwg.mxu0
    %313 = vmatpush.bf16.msra.mxu0 0
    %314 = vmatpush.bf16.msra.mxu0 0
    %315 = vmatpush.bf16.msra.mxu0 0
    %316 = vmatpush.bf16.msra.mxu0 0
    %317 = vmatpush.bf16.msra.mxu0 0
    %318 = vmatpush.bf16.msra.mxu0 %v185
    %319 = vmatpush.bf16.msra.mxu0 %v180
    %320 = vmatpush.bf16.msra.mxu0 %v175
    %321 = vmatmul.bf16.gmra.mxu0 %v272
    %v322 = vpop.f32.mrf.mxu0
    %v323 = vadd.f32 %v255, %v322
    %v324 = vpop.f32.mrf.mxu0
    %325 = vdwg.mxu0
    %326 = vmatpush.bf16.msra.mxu0 0
    %327 = vmatpush.bf16.msra.mxu0 0
    %328 = vmatpush.bf16.msra.mxu0 0
    %329 = vmatpush.bf16.msra.mxu0 0
    %330 = vmatpush.bf16.msra.mxu0 0
    %331 = vmatpush.bf16.msra.mxu0 %v186
    %332 = vmatpush.bf16.msra.mxu0 %v181
    %333 = vmatpush.bf16.msra.mxu0 %v176
    %334 = vmatmul.bf16.gmra.mxu0 %v272
    %v335 = vpop.f32.mrf.mxu0
    %v336 = vadd.f32 %v268, %v335
    %v337 = vpop.f32.mrf.mxu0
    %338 = vdwg.mxu0
    %v340 = vsel %vm202, %v123, 0
    %342 = vmatpush.bf16.msra.mxu0 0
    %343 = vmatpush.bf16.msra.mxu0 0
    %344 = vmatpush.bf16.msra.mxu0 0
    %345 = vmatpush.bf16.msra.mxu0 0
    %346 = vmatpush.bf16.msra.mxu0 0
    %347 = vmatpush.bf16.msra.mxu0 %v182
    %348 = vmatpush.bf16.msra.mxu0 %v177
    %349 = vmatpush.bf16.msra.mxu0 %v172
    %350 = vmatmul.bf16.gmra.mxu0 %v340
    %v351 = vpop.f32.mrf.mxu0
    %v352 = vadd.f32 0.0, %v351
    %v353 = vpop.f32.mrf.mxu0
    %354 = vdwg.mxu0
    %355 = vmatpush.bf16.msra.mxu0 0
    %356 = vmatpush.bf16.msra.mxu0 0
    %357 = vmatpush.bf16.msra.mxu0 0
    %358 = vmatpush.bf16.msra.mxu0 0
    %359 = vmatpush.bf16.msra.mxu0 0
    %360 = vmatpush.bf16.msra.mxu0 %v183
    %361 = vmatpush.bf16.msra.mxu0 %v178
    %362 = vmatpush.bf16.msra.mxu0 %v173
    %363 = vmatmul.bf16.gmra.mxu0 %v340
    %v364 = vpop.f32.mrf.mxu0
    %v365 = vadd.f32 0.0, %v364
    %v366 = vpop.f32.mrf.mxu0
    %367 = vdwg.mxu0
    %368 = vmatpush.bf16.msra.mxu0 0
    %369 = vmatpush.bf16.msra.mxu0 0
    %370 = vmatpush.bf16.msra.mxu0 0
    %371 = vmatpush.bf16.msra.mxu0 0
    %372 = vmatpush.bf16.msra.mxu0 0
    %373 = vmatpush.bf16.msra.mxu0 %v184
    %374 = vmatpush.bf16.msra.mxu0 %v179
    %375 = vmatpush.bf16.msra.mxu0 %v174
    %376 = vmatmul.bf16.gmra.mxu0 %v340
    %v377 = vpop.f32.mrf.mxu0
    %v378 = vadd.f32 0.0, %v377
    %v379 = vpop.f32.mrf.mxu0
    %380 = vdwg.mxu0
    %381 = vmatpush.bf16.msra.mxu0 0
    %382 = vmatpush.bf16.msra.mxu0 0
    %383 = vmatpush.bf16.msra.mxu0 0
    %384 = vmatpush.bf16.msra.mxu0 0
    %385 = vmatpush.bf16.msra.mxu0 0
    %386 = vmatpush.bf16.msra.mxu0 %v185
    %387 = vmatpush.bf16.msra.mxu0 %v180
    %388 = vmatpush.bf16.msra.mxu0 %v175
    %389 = vmatmul.bf16.gmra.mxu0 %v340
    %v390 = vpop.f32.mrf.mxu0
    %v391 = vadd.f32 0.0, %v390
    %v392 = vpop.f32.mrf.mxu0
    %393 = vdwg.mxu0
    %394 = vmatpush.bf16.msra.mxu0 0
    %395 = vmatpush.bf16.msra.mxu0 0
    %396 = vmatpush.bf16.msra.mxu0 0
    %397 = vmatpush.bf16.msra.mxu0 0
    %398 = vmatpush.bf16.msra.mxu0 0
    %399 = vmatpush.bf16.msra.mxu0 %v186
    %400 = vmatpush.bf16.msra.mxu0 %v181
    %401 = vmatpush.bf16.msra.mxu0 %v176
    %402 = vmatmul.bf16.gmra.mxu0 %v340
    %v403 = vpop.f32.mrf.mxu0
    %v404 = vadd.f32 0.0, %v403
    %v405 = vpop.f32.mrf.mxu0
    %406 = vdwg.mxu0
    %v407 = vadd.f32 %v284, %v352
    %v408 = vadd.f32 %v297, %v365
    %v409 = vadd.f32 %v310, %v378
    %v410 = vadd.f32 %v323, %v391
    %v411 = vadd.f32 %v336, %v404
    %v413 = vperm.slane %v110, 0
    %v414 = vperm.slane %v110, 1
    %v415 = vperm.slane %v110, 2
    %v416 = vperm.slane %v110, 3
    %v417 = vperm.slane %v110, 4
    %v423 = vmul.f32 %v407, %v413
    %v424 = vmul.f32 %v408, %v414
    %v425 = vmul.f32 %v409, %v415
    %v426 = vmul.f32 %v410, %v416
    %v427 = vmul.f32 %v411, %v417
    %v428 = vand.u32 2147483647, %v423
    %vm429 = vcmp.le.f32.partialorder %v428, 0.7853982
    %vm430 = vcmp.lt.s32.totalorder %v423, 0
    %v431 = vand.u32 %v423, 2139095040
    %v432 = vshrl.u32 %v431, 23
    %v433 = vsub.s32 %v432, 127
    %v434 = vand.u32 2147483647, %v423
    %v435 = vand.u32 %v434, 8388607
    %v436 = vor.u32 %v435, 8388608
    %v437 = vsub.s32 0, %v436
    %v438 = vadd.s32 %v433, 1
    %vm439 = vcmp.gt.s32.totalorder %v438, 0
    %v440 = vsel %vm439, %v438, 0
    %v441 = vshrl.u32 %v440, 5
    %v442 = vand.u32 %v440, 31
    %v443 = vsub.s32 32, %v442
    %v444 = vshrl.u32 683565275, %v443
    %v445 = vshll.u32 683565275, %v442
    %v446 = vshrl.u32 2475754826, %v443
    %v447 = vor.u32 %v445, %v446
    %v448 = vshll.u32 2475754826, %v442
    %v449 = vshrl.u32 2131351028, %v443
    %v450 = vor.u32 %v448, %v449
    %v451 = vshll.u32 2131351028, %v442
    %v452 = vshrl.u32 2102212464, %v443
    %v453 = vor.u32 %v451, %v452
    %v454 = vshll.u32 2102212464, %v442
    %v455 = vshrl.u32 920167782, %v443
    %v456 = vor.u32 %v454, %v455
    %v457 = vshll.u32 920167782, %v442
    %v458 = vshrl.u32 1326507024, %v443
    %v459 = vor.u32 %v457, %v458
    %vm460 = vcmp.lt.s32.totalorder %v441, 1
    %vm461 = vcmp.lt.s32.totalorder %v441, 2
    %vm462 = vcmp.lt.s32.totalorder %v441, 3
    %vm463 = vcmp.lt.s32.totalorder %v441, 4
    %v464 = vsel %vm460, %v444, %v447
    %v465 = vsel %vm463, %v453, 2102212464
    %v466 = vsel %vm462, %v450, %v465
    %v467 = vsel %vm461, %v464, %v466
    %v468 = vsel %vm460, %v447, %v450
    %v469 = vsel %vm463, %v456, 920167782
    %v470 = vsel %vm462, %v453, %v469
    %v471 = vsel %vm461, %v468, %v470
    %v472 = vsel %vm460, %v450, %v453
    %v473 = vsel %vm463, %v459, 1326507024
    %v474 = vsel %vm462, %v456, %v473
    %v475 = vsel %vm461, %v472, %v474
    %v476 = vshll.u32 %v436, 8
    %v477 = vand.u32 %v476, 65535
    %v478 = vshrl.u32 %v476, 16
    %v479 = vand.u32 %v475, 65535
    %v480 = vshrl.u32 %v475, 16
    %v481 = vmul.u32 %v477, %v479
    %v482 = vmul.u32 %v477, %v480
    %v483 = vmul.u32 %v478, %v479
    %v484 = vmul.u32 %v478, %v480
    %v485 = vshll.u32 %v482, 16
    %v486 = vshrl.u32 %v482, 16
    %v487 = vshll.u32 %v483, 16
    %v488 = vshrl.u32 %v483, 16
    %vm489 = vc.u32 %v481, %v485
    %v490 = vsel %vm489, 1, 0
    %v491 = vadd.s32 %v481, %v485
    %v492 = vadd.s32 %v484, %v490
    %vm493 = vc.u32 %v491, %v487
    %v494 = vsel %vm493, 1, 0
    %v495 = vadd.s32 %v491, %v487
    %v496 = vadd.s32 %v492, %v494
    %v497 = vadd.s32 %v496, %v486
    %v498 = vadd.s32 %v497, %v488
    %v499 = vand.u32 %v476, 65535
    %v500 = vshrl.u32 %v476, 16
    %v501 = vand.u32 %v471, 65535
    %v502 = vshrl.u32 %v471, 16
    %v503 = vmul.u32 %v499, %v501
    %v504 = vmul.u32 %v499, %v502
    %v505 = vmul.u32 %v500, %v501
    %v506 = vmul.u32 %v500, %v502
    %v507 = vshll.u32 %v504, 16
    %v508 = vshrl.u32 %v504, 16
    %v509 = vshll.u32 %v505, 16
    %v510 = vshrl.u32 %v505, 16
    %vm511 = vc.u32 %v503, %v507
    %v512 = vsel %vm511, 1, 0
    %v513 = vadd.s32 %v503, %v507
    %v514 = vadd.s32 %v506, %v512
    %vm515 = vc.u32 %v513, %v509
    %v516 = vsel %vm515, 1, 0
    %v517 = vadd.s32 %v513, %v509
    %v518 = vadd.s32 %v514, %v516
    %v519 = vadd.s32 %v518, %v508
    %v520 = vadd.s32 %v519, %v510
    %v521 = vmul.u32 %v476, %v467
    %v522 = vadd.s32 %v498, %v517
    %vm523 = vc.u32 %v498, %v517
    %v524 = vadd.s32 %v520, 1
    %v525 = vsel %vm523, %v524, %v520
    %v526 = vadd.s32 %v521, %v525
    %v527 = vadd.s32 %v526, 536870912
    %v528 = vshrl.u32 %v527, 30
    %v529 = vshll.u32 %v528, 30
    %v530 = vsub.s32 %v526, %v529
    %vm531 = vcmp.lt.s32.totalorder %v530, 0
    %v532 = vsub.s32 0, %v530
    %v533 = vsel %vm531, %v532, %v530
    %v534 = vclz %v533
    %v535 = vsub.s32 %v534, 2
    %vm536 = vcmp.gt.s32.totalorder 0, %v535
    %v537 = vsel %vm536, 0, %v535
    %v538 = vsub.s32 32, %v537
    %v539 = vshll.u32 %v530, %v537
    %v540 = vshrl.u32 %v522, %v538
    %v541 = vor.u32 %v539, %v540
    %v542 = vsub.s32 4294967266, %v537
    %v543 = vadd.s32 %v542, 127
    %v544 = vshll.u32 %v543, 23
    %v545 = vor.u32 4788187, %v544
    %v546 = vand.u32 2147483647, %v545
    %v548 = vcvt.s32.f32 %v541
    %v549 = vmul.f32 %v548, %v546
    %v550 = vxor.u32 %v549, 2147483648
    %v551 = vsel %vm430, %v550, %v549
    %v552 = vsub.s32 4, %v528
    %v553 = vsel %vm430, %v552, %v528
    %v554 = vsel %vm429, %v423, %v551
    %v555 = vsel %vm429, 0, %v553
    %v556 = vmul.f32 %v554, %v554
    %v557 = vmul.f32 %v556, -0.001358992
    %v558 = vadd.f32 %v557, 0.041655596
    %v559 = vmul.f32 %v556, %v558
    %v560 = vadd.f32 %v559, -0.4999988
    %v561 = vmul.f32 %v556, %v560
    %v562 = vadd.f32 1.0, %v561
    %v563 = vmul.f32 %v554, %v554
    %v564 = vmul.f32 %v563, -0.00019511016
    %v565 = vadd.f32 %v564, 0.008332121
    %v566 = vmul.f32 %v563, %v565
    %v567 = vadd.f32 %v566, -0.16666654
    %v568 = vmul.f32 %v563, %v567
    %v569 = vadd.f32 %v568, 1.0
    %v570 = vmul.f32 %v569, %v554
    %vm571 = vweird.f32 %v423
    %v572 = vadd.s32 %v555, 3
    %v573 = vand.u32 %v572, 3
    %vm574 = vcmp.lt.s32.totalorder %v573, 2
    %vm575 = vcmp.eq.s32.totalorder %v573, 0
    %v576 = vxor.u32 %v570, 2147483648
    %v577 = vsel %vm575, %v562, %v576
    %vm578 = vcmp.eq.s32.totalorder %v573, 2
    %v579 = vxor.u32 %v562, 2147483648
    %v580 = vsel %vm578, %v579, %v570
    %v581 = vsel %vm574, %v577, %v580
    %v582 = vsel %vm571, nan, %v581
    %v583 = vand.u32 2147483647, %v424
    %vm584 = vcmp.le.f32.partialorder %v583, 0.7853982
    %vm585 = vcmp.lt.s32.totalorder %v424, 0
    %v586 = vand.u32 %v424, 2139095040
    %v587 = vshrl.u32 %v586, 23
    %v588 = vsub.s32 %v587, 127
    %v589 = vand.u32 2147483647, %v424
    %v590 = vand.u32 %v589, 8388607
    %v591 = vor.u32 %v590, 8388608
    %v592 = vsub.s32 0, %v591
    %v593 = vadd.s32 %v588, 1
    %vm594 = vcmp.gt.s32.totalorder %v593, 0
    %v595 = vsel %vm594, %v593, 0
    %v596 = vshrl.u32 %v595, 5
    %v597 = vand.u32 %v595, 31
    %v598 = vsub.s32 32, %v597
    %v599 = vshrl.u32 683565275, %v598
    %v600 = vshll.u32 683565275, %v597
    %v601 = vshrl.u32 2475754826, %v598
    %v602 = vor.u32 %v600, %v601
    %v603 = vshll.u32 2475754826, %v597
    %v604 = vshrl.u32 2131351028, %v598
    %v605 = vor.u32 %v603, %v604
    %v606 = vshll.u32 2131351028, %v597
    %v607 = vshrl.u32 2102212464, %v598
    %v608 = vor.u32 %v606, %v607
    %v609 = vshll.u32 2102212464, %v597
    %v610 = vshrl.u32 920167782, %v598
    %v611 = vor.u32 %v609, %v610
    %v612 = vshll.u32 920167782, %v597
    %v613 = vshrl.u32 1326507024, %v598
    %v614 = vor.u32 %v612, %v613
    %vm615 = vcmp.lt.s32.totalorder %v596, 1
    %vm616 = vcmp.lt.s32.totalorder %v596, 2
    %vm617 = vcmp.lt.s32.totalorder %v596, 3
    %vm618 = vcmp.lt.s32.totalorder %v596, 4
    %v619 = vsel %vm615, %v599, %v602
    %v620 = vsel %vm618, %v608, 2102212464
    %v621 = vsel %vm617, %v605, %v620
    %v622 = vsel %vm616, %v619, %v621
    %v623 = vsel %vm615, %v602, %v605
    %v624 = vsel %vm618, %v611, 920167782
    %v625 = vsel %vm617, %v608, %v624
    %v626 = vsel %vm616, %v623, %v625
    %v627 = vsel %vm615, %v605, %v608
    %v628 = vsel %vm618, %v614, 1326507024
    %v629 = vsel %vm617, %v611, %v628
    %v630 = vsel %vm616, %v627, %v629
    %v631 = vshll.u32 %v591, 8
    %v632 = vand.u32 %v631, 65535
    %v633 = vshrl.u32 %v631, 16
    %v634 = vand.u32 %v630, 65535
    %v635 = vshrl.u32 %v630, 16
    %v636 = vmul.u32 %v632, %v634
    %v637 = vmul.u32 %v632, %v635
    %v638 = vmul.u32 %v633, %v634
    %v639 = vmul.u32 %v633, %v635
    %v640 = vshll.u32 %v637, 16
    %v641 = vshrl.u32 %v637, 16
    %v642 = vshll.u32 %v638, 16
    %v643 = vshrl.u32 %v638, 16
    %vm644 = vc.u32 %v636, %v640
    %v645 = vsel %vm644, 1, 0
    %v646 = vadd.s32 %v636, %v640
    %v647 = vadd.s32 %v639, %v645
    %vm648 = vc.u32 %v646, %v642
    %v649 = vsel %vm648, 1, 0
    %v650 = vadd.s32 %v646, %v642
    %v651 = vadd.s32 %v647, %v649
    %v652 = vadd.s32 %v651, %v641
    %v653 = vadd.s32 %v652, %v643
    %v654 = vand.u32 %v631, 65535
    %v655 = vshrl.u32 %v631, 16
    %v656 = vand.u32 %v626, 65535
    %v657 = vshrl.u32 %v626, 16
    %v658 = vmul.u32 %v654, %v656
    %v659 = vmul.u32 %v654, %v657
    %v660 = vmul.u32 %v655, %v656
    %v661 = vmul.u32 %v655, %v657
    %v662 = vshll.u32 %v659, 16
    %v663 = vshrl.u32 %v659, 16
    %v664 = vshll.u32 %v660, 16
    %v665 = vshrl.u32 %v660, 16
    %vm666 = vc.u32 %v658, %v662
    %v667 = vsel %vm666, 1, 0
    %v668 = vadd.s32 %v658, %v662
    %v669 = vadd.s32 %v661, %v667
    %vm670 = vc.u32 %v668, %v664
    %v671 = vsel %vm670, 1, 0
    %v672 = vadd.s32 %v668, %v664
    %v673 = vadd.s32 %v669, %v671
    %v674 = vadd.s32 %v673, %v663
    %v675 = vadd.s32 %v674, %v665
    %v676 = vmul.u32 %v631, %v622
    %v677 = vadd.s32 %v653, %v672
    %vm678 = vc.u32 %v653, %v672
    %v679 = vadd.s32 %v675, 1
    %v680 = vsel %vm678, %v679, %v675
    %v681 = vadd.s32 %v676, %v680
    %v682 = vadd.s32 %v681, 536870912
    %v683 = vshrl.u32 %v682, 30
    %v684 = vshll.u32 %v683, 30
    %v685 = vsub.s32 %v681, %v684
    %vm686 = vcmp.lt.s32.totalorder %v685, 0
    %v687 = vsub.s32 0, %v685
    %v688 = vsel %vm686, %v687, %v685
    %v689 = vclz %v688
    %v690 = vsub.s32 %v689, 2
    %vm691 = vcmp.gt.s32.totalorder 0, %v690
    %v692 = vsel %vm691, 0, %v690
    %v693 = vsub.s32 32, %v692
    %v694 = vshll.u32 %v685, %v692
    %v695 = vshrl.u32 %v677, %v693
    %v696 = vor.u32 %v694, %v695
    %v697 = vsub.s32 4294967266, %v692
    %v698 = vadd.s32 %v697, 127
    %v699 = vshll.u32 %v698, 23
    %v700 = vor.u32 4788187, %v699
    %v701 = vand.u32 2147483647, %v700
    %v703 = vcvt.s32.f32 %v696
    %v704 = vmul.f32 %v703, %v701
    %v705 = vxor.u32 %v704, 2147483648
    %v706 = vsel %vm585, %v705, %v704
    %v707 = vsub.s32 4, %v683
    %v708 = vsel %vm585, %v707, %v683
    %v709 = vsel %vm584, %v424, %v706
    %v710 = vsel %vm584, 0, %v708
    %v711 = vmul.f32 %v709, %v709
    %v712 = vmul.f32 %v711, -0.001358992
    %v713 = vadd.f32 %v712, 0.041655596
    %v714 = vmul.f32 %v711, %v713
    %v715 = vadd.f32 %v714, -0.4999988
    %v716 = vmul.f32 %v711, %v715
    %v717 = vadd.f32 1.0, %v716
    %v718 = vmul.f32 %v709, %v709
    %v719 = vmul.f32 %v718, -0.00019511016
    %v720 = vadd.f32 %v719, 0.008332121
    %v721 = vmul.f32 %v718, %v720
    %v722 = vadd.f32 %v721, -0.16666654
    %v723 = vmul.f32 %v718, %v722
    %v724 = vadd.f32 %v723, 1.0
    %v725 = vmul.f32 %v724, %v709
    %vm726 = vweird.f32 %v424
    %v727 = vadd.s32 %v710, 3
    %v728 = vand.u32 %v727, 3
    %vm729 = vcmp.lt.s32.totalorder %v728, 2
    %vm730 = vcmp.eq.s32.totalorder %v728, 0
    %v731 = vxor.u32 %v725, 2147483648
    %v732 = vsel %vm730, %v717, %v731
    %vm733 = vcmp.eq.s32.totalorder %v728, 2
    %v734 = vxor.u32 %v717, 2147483648
    %v735 = vsel %vm733, %v734, %v725
    %v736 = vsel %vm729, %v732, %v735
    %v737 = vsel %vm726, nan, %v736
    %v738 = vand.u32 2147483647, %v425
    %vm739 = vcmp.le.f32.partialorder %v738, 0.7853982
    %vm740 = vcmp.lt.s32.totalorder %v425, 0
    %v741 = vand.u32 %v425, 2139095040
    %v742 = vshrl.u32 %v741, 23
    %v743 = vsub.s32 %v742, 127
    %v744 = vand.u32 2147483647, %v425
    %v745 = vand.u32 %v744, 8388607
    %v746 = vor.u32 %v745, 8388608
    %v747 = vsub.s32 0, %v746
    %v748 = vadd.s32 %v743, 1
    %vm749 = vcmp.gt.s32.totalorder %v748, 0
    %v750 = vsel %vm749, %v748, 0
    %v751 = vshrl.u32 %v750, 5
    %v752 = vand.u32 %v750, 31
    %v753 = vsub.s32 32, %v752
    %v754 = vshrl.u32 683565275, %v753
    %v755 = vshll.u32 683565275, %v752
    %v756 = vshrl.u32 2475754826, %v753
    %v757 = vor.u32 %v755, %v756
    %v758 = vshll.u32 2475754826, %v752
    %v759 = vshrl.u32 2131351028, %v753
    %v760 = vor.u32 %v758, %v759
    %v761 = vshll.u32 2131351028, %v752
    %v762 = vshrl.u32 2102212464, %v753
    %v763 = vor.u32 %v761, %v762
    %v764 = vshll.u32 2102212464, %v752
    %v765 = vshrl.u32 920167782, %v753
    %v766 = vor.u32 %v764, %v765
    %v767 = vshll.u32 920167782, %v752
    %v768 = vshrl.u32 1326507024, %v753
    %v769 = vor.u32 %v767, %v768
    %vm770 = vcmp.lt.s32.totalorder %v751, 1
    %vm771 = vcmp.lt.s32.totalorder %v751, 2
    %vm772 = vcmp.lt.s32.totalorder %v751, 3
    %vm773 = vcmp.lt.s32.totalorder %v751, 4
    %v774 = vsel %vm770, %v754, %v757
    %v775 = vsel %vm773, %v763, 2102212464
    %v776 = vsel %vm772, %v760, %v775
    %v777 = vsel %vm771, %v774, %v776
    %v778 = vsel %vm770, %v757, %v760
    %v779 = vsel %vm773, %v766, 920167782
    %v780 = vsel %vm772, %v763, %v779
    %v781 = vsel %vm771, %v778, %v780
    %v782 = vsel %vm770, %v760, %v763
    %v783 = vsel %vm773, %v769, 1326507024
    %v784 = vsel %vm772, %v766, %v783
    %v785 = vsel %vm771, %v782, %v784
    %v786 = vshll.u32 %v746, 8
    %v787 = vand.u32 %v786, 65535
    %v788 = vshrl.u32 %v786, 16
    %v789 = vand.u32 %v785, 65535
    %v790 = vshrl.u32 %v785, 16
    %v791 = vmul.u32 %v787, %v789
    %v792 = vmul.u32 %v787, %v790
    %v793 = vmul.u32 %v788, %v789
    %v794 = vmul.u32 %v788, %v790
    %v795 = vshll.u32 %v792, 16
    %v796 = vshrl.u32 %v792, 16
    %v797 = vshll.u32 %v793, 16
    %v798 = vshrl.u32 %v793, 16
    %vm799 = vc.u32 %v791, %v795
    %v800 = vsel %vm799, 1, 0
    %v801 = vadd.s32 %v791, %v795
    %v802 = vadd.s32 %v794, %v800
    %vm803 = vc.u32 %v801, %v797
    %v804 = vsel %vm803, 1, 0
    %v805 = vadd.s32 %v801, %v797
    %v806 = vadd.s32 %v802, %v804
    %v807 = vadd.s32 %v806, %v796
    %v808 = vadd.s32 %v807, %v798
    %v809 = vand.u32 %v786, 65535
    %v810 = vshrl.u32 %v786, 16
    %v811 = vand.u32 %v781, 65535
    %v812 = vshrl.u32 %v781, 16
    %v813 = vmul.u32 %v809, %v811
    %v814 = vmul.u32 %v809, %v812
    %v815 = vmul.u32 %v810, %v811
    %v816 = vmul.u32 %v810, %v812
    %v817 = vshll.u32 %v814, 16
    %v818 = vshrl.u32 %v814, 16
    %v819 = vshll.u32 %v815, 16
    %v820 = vshrl.u32 %v815, 16
    %vm821 = vc.u32 %v813, %v817
    %v822 = vsel %vm821, 1, 0
    %v823 = vadd.s32 %v813, %v817
    %v824 = vadd.s32 %v816, %v822
    %vm825 = vc.u32 %v823, %v819
    %v826 = vsel %vm825, 1, 0
    %v827 = vadd.s32 %v823, %v819
    %v828 = vadd.s32 %v824, %v826
    %v829 = vadd.s32 %v828, %v818
    %v830 = vadd.s32 %v829, %v820
    %v831 = vmul.u32 %v786, %v777
    %v832 = vadd.s32 %v808, %v827
    %vm833 = vc.u32 %v808, %v827
    %v834 = vadd.s32 %v830, 1
    %v835 = vsel %vm833, %v834, %v830
    %v836 = vadd.s32 %v831, %v835
    %v837 = vadd.s32 %v836, 536870912
    %v838 = vshrl.u32 %v837, 30
    %v839 = vshll.u32 %v838, 30
    %v840 = vsub.s32 %v836, %v839
    %vm841 = vcmp.lt.s32.totalorder %v840, 0
    %v842 = vsub.s32 0, %v840
    %v843 = vsel %vm841, %v842, %v840
    %v844 = vclz %v843
    %v845 = vsub.s32 %v844, 2
    %vm846 = vcmp.gt.s32.totalorder 0, %v845
    %v847 = vsel %vm846, 0, %v845
    %v848 = vsub.s32 32, %v847
    %v849 = vshll.u32 %v840, %v847
    %v850 = vshrl.u32 %v832, %v848
    %v851 = vor.u32 %v849, %v850
    %v852 = vsub.s32 4294967266, %v847
    %v853 = vadd.s32 %v852, 127
    %v854 = vshll.u32 %v853, 23
    %v855 = vor.u32 4788187, %v854
    %v856 = vand.u32 2147483647, %v855
    %v858 = vcvt.s32.f32 %v851
    %v859 = vmul.f32 %v858, %v856
    %v860 = vxor.u32 %v859, 2147483648
    %v861 = vsel %vm740, %v860, %v859
    %v862 = vsub.s32 4, %v838
    %v863 = vsel %vm740, %v862, %v838
    %v864 = vsel %vm739, %v425, %v861
    %v865 = vsel %vm739, 0, %v863
    %v866 = vmul.f32 %v864, %v864
    %v867 = vmul.f32 %v866, -0.001358992
    %v868 = vadd.f32 %v867, 0.041655596
    %v869 = vmul.f32 %v866, %v868
    %v870 = vadd.f32 %v869, -0.4999988
    %v871 = vmul.f32 %v866, %v870
    %v872 = vadd.f32 1.0, %v871
    %v873 = vmul.f32 %v864, %v864
    %v874 = vmul.f32 %v873, -0.00019511016
    %v875 = vadd.f32 %v874, 0.008332121
    %v876 = vmul.f32 %v873, %v875
    %v877 = vadd.f32 %v876, -0.16666654
    %v878 = vmul.f32 %v873, %v877
    %v879 = vadd.f32 %v878, 1.0
    %v880 = vmul.f32 %v879, %v864
    %vm881 = vweird.f32 %v425
    %v882 = vadd.s32 %v865, 3
    %v883 = vand.u32 %v882, 3
    %vm884 = vcmp.lt.s32.totalorder %v883, 2
    %vm885 = vcmp.eq.s32.totalorder %v883, 0
    %v886 = vxor.u32 %v880, 2147483648
    %v887 = vsel %vm885, %v872, %v886
    %vm888 = vcmp.eq.s32.totalorder %v883, 2
    %v889 = vxor.u32 %v872, 2147483648
    %v890 = vsel %vm888, %v889, %v880
    %v891 = vsel %vm884, %v887, %v890
    %v892 = vsel %vm881, nan, %v891
    %v893 = vand.u32 2147483647, %v426
    %vm894 = vcmp.le.f32.partialorder %v893, 0.7853982
    %vm895 = vcmp.lt.s32.totalorder %v426, 0
    %v896 = vand.u32 %v426, 2139095040
    %v897 = vshrl.u32 %v896, 23
    %v898 = vsub.s32 %v897, 127
    %v899 = vand.u32 2147483647, %v426
    %v900 = vand.u32 %v899, 8388607
    %v901 = vor.u32 %v900, 8388608
    %v902 = vsub.s32 0, %v901
    %v903 = vadd.s32 %v898, 1
    %vm904 = vcmp.gt.s32.totalorder %v903, 0
    %v905 = vsel %vm904, %v903, 0
    %v906 = vshrl.u32 %v905, 5
    %v907 = vand.u32 %v905, 31
    %v908 = vsub.s32 32, %v907
    %v909 = vshrl.u32 683565275, %v908
    %v910 = vshll.u32 683565275, %v907
    %v911 = vshrl.u32 2475754826, %v908
    %v912 = vor.u32 %v910, %v911
    %v913 = vshll.u32 2475754826, %v907
    %v914 = vshrl.u32 2131351028, %v908
    %v915 = vor.u32 %v913, %v914
    %v916 = vshll.u32 2131351028, %v907
    %v917 = vshrl.u32 2102212464, %v908
    %v918 = vor.u32 %v916, %v917
    %v919 = vshll.u32 2102212464, %v907
    %v920 = vshrl.u32 920167782, %v908
    %v921 = vor.u32 %v919, %v920
    %v922 = vshll.u32 920167782, %v907
    %v923 = vshrl.u32 1326507024, %v908
    %v924 = vor.u32 %v922, %v923
    %vm925 = vcmp.lt.s32.totalorder %v906, 1
    %vm926 = vcmp.lt.s32.totalorder %v906, 2
    %vm927 = vcmp.lt.s32.totalorder %v906, 3
    %vm928 = vcmp.lt.s32.totalorder %v906, 4
    %v929 = vsel %vm925, %v909, %v912
    %v930 = vsel %vm928, %v918, 2102212464
    %v931 = vsel %vm927, %v915, %v930
    %v932 = vsel %vm926, %v929, %v931
    %v933 = vsel %vm925, %v912, %v915
    %v934 = vsel %vm928, %v921, 920167782
    %v935 = vsel %vm927, %v918, %v934
    %v936 = vsel %vm926, %v933, %v935
    %v937 = vsel %vm925, %v915, %v918
    %v938 = vsel %vm928, %v924, 1326507024
    %v939 = vsel %vm927, %v921, %v938
    %v940 = vsel %vm926, %v937, %v939
    %v941 = vshll.u32 %v901, 8
    %v942 = vand.u32 %v941, 65535
    %v943 = vshrl.u32 %v941, 16
    %v944 = vand.u32 %v940, 65535
    %v945 = vshrl.u32 %v940, 16
    %v946 = vmul.u32 %v942, %v944
    %v947 = vmul.u32 %v942, %v945
    %v948 = vmul.u32 %v943, %v944
    %v949 = vmul.u32 %v943, %v945
    %v950 = vshll.u32 %v947, 16
    %v951 = vshrl.u32 %v947, 16
    %v952 = vshll.u32 %v948, 16
    %v953 = vshrl.u32 %v948, 16
    %vm954 = vc.u32 %v946, %v950
    %v955 = vsel %vm954, 1, 0
    %v956 = vadd.s32 %v946, %v950
    %v957 = vadd.s32 %v949, %v955
    %vm958 = vc.u32 %v956, %v952
    %v959 = vsel %vm958, 1, 0
    %v960 = vadd.s32 %v956, %v952
    %v961 = vadd.s32 %v957, %v959
    %v962 = vadd.s32 %v961, %v951
    %v963 = vadd.s32 %v962, %v953
    %v964 = vand.u32 %v941, 65535
    %v965 = vshrl.u32 %v941, 16
    %v966 = vand.u32 %v936, 65535
    %v967 = vshrl.u32 %v936, 16
    %v968 = vmul.u32 %v964, %v966
    %v969 = vmul.u32 %v964, %v967
    %v970 = vmul.u32 %v965, %v966
    %v971 = vmul.u32 %v965, %v967
    %v972 = vshll.u32 %v969, 16
    %v973 = vshrl.u32 %v969, 16
    %v974 = vshll.u32 %v970, 16
    %v975 = vshrl.u32 %v970, 16
    %vm976 = vc.u32 %v968, %v972
    %v977 = vsel %vm976, 1, 0
    %v978 = vadd.s32 %v968, %v972
    %v979 = vadd.s32 %v971, %v977
    %vm980 = vc.u32 %v978, %v974
    %v981 = vsel %vm980, 1, 0
    %v982 = vadd.s32 %v978, %v974
    %v983 = vadd.s32 %v979, %v981
    %v984 = vadd.s32 %v983, %v973
    %v985 = vadd.s32 %v984, %v975
    %v986 = vmul.u32 %v941, %v932
    %v987 = vadd.s32 %v963, %v982
    %vm988 = vc.u32 %v963, %v982
    %v989 = vadd.s32 %v985, 1
    %v990 = vsel %vm988, %v989, %v985
    %v991 = vadd.s32 %v986, %v990
    %v992 = vadd.s32 %v991, 536870912
    %v993 = vshrl.u32 %v992, 30
    %v994 = vshll.u32 %v993, 30
    %v995 = vsub.s32 %v991, %v994
    %vm996 = vcmp.lt.s32.totalorder %v995, 0
    %v997 = vsub.s32 0, %v995
    %v998 = vsel %vm996, %v997, %v995
    %v999 = vclz %v998
    %v1000 = vsub.s32 %v999, 2
    %vm1001 = vcmp.gt.s32.totalorder 0, %v1000
    %v1002 = vsel %vm1001, 0, %v1000
    %v1003 = vsub.s32 32, %v1002
    %v1004 = vshll.u32 %v995, %v1002
    %v1005 = vshrl.u32 %v987, %v1003
    %v1006 = vor.u32 %v1004, %v1005
    %v1007 = vsub.s32 4294967266, %v1002
    %v1008 = vadd.s32 %v1007, 127
    %v1009 = vshll.u32 %v1008, 23
    %v1010 = vor.u32 4788187, %v1009
    %v1011 = vand.u32 2147483647, %v1010
    %v1013 = vcvt.s32.f32 %v1006
    %v1014 = vmul.f32 %v1013, %v1011
    %v1015 = vxor.u32 %v1014, 2147483648
    %v1016 = vsel %vm895, %v1015, %v1014
    %v1017 = vsub.s32 4, %v993
    %v1018 = vsel %vm895, %v1017, %v993
    %v1019 = vsel %vm894, %v426, %v1016
    %v1020 = vsel %vm894, 0, %v1018
    %v1021 = vmul.f32 %v1019, %v1019
    %v1022 = vmul.f32 %v1021, -0.001358992
    %v1023 = vadd.f32 %v1022, 0.041655596
    %v1024 = vmul.f32 %v1021, %v1023
    %v1025 = vadd.f32 %v1024, -0.4999988
    %v1026 = vmul.f32 %v1021, %v1025
    %v1027 = vadd.f32 1.0, %v1026
    %v1028 = vmul.f32 %v1019, %v1019
    %v1029 = vmul.f32 %v1028, -0.00019511016
    %v1030 = vadd.f32 %v1029, 0.008332121
    %v1031 = vmul.f32 %v1028, %v1030
    %v1032 = vadd.f32 %v1031, -0.16666654
    %v1033 = vmul.f32 %v1028, %v1032
    %v1034 = vadd.f32 %v1033, 1.0
    %v1035 = vmul.f32 %v1034, %v1019
    %vm1036 = vweird.f32 %v426
    %v1037 = vadd.s32 %v1020, 3
    %v1038 = vand.u32 %v1037, 3
    %vm1039 = vcmp.lt.s32.totalorder %v1038, 2
    %vm1040 = vcmp.eq.s32.totalorder %v1038, 0
    %v1041 = vxor.u32 %v1035, 2147483648
    %v1042 = vsel %vm1040, %v1027, %v1041
    %vm1043 = vcmp.eq.s32.totalorder %v1038, 2
    %v1044 = vxor.u32 %v1027, 2147483648
    %v1045 = vsel %vm1043, %v1044, %v1035
    %v1046 = vsel %vm1039, %v1042, %v1045
    %v1047 = vsel %vm1036, nan, %v1046
    %v1048 = vand.u32 2147483647, %v427
    %vm1049 = vcmp.le.f32.partialorder %v1048, 0.7853982
    %vm1050 = vcmp.lt.s32.totalorder %v427, 0
    %v1051 = vand.u32 %v427, 2139095040
    %v1052 = vshrl.u32 %v1051, 23
    %v1053 = vsub.s32 %v1052, 127
    %v1054 = vand.u32 2147483647, %v427
    %v1055 = vand.u32 %v1054, 8388607
    %v1056 = vor.u32 %v1055, 8388608
    %v1057 = vsub.s32 0, %v1056
    %v1058 = vadd.s32 %v1053, 1
    %vm1059 = vcmp.gt.s32.totalorder %v1058, 0
    %v1060 = vsel %vm1059, %v1058, 0
    %v1061 = vshrl.u32 %v1060, 5
    %v1062 = vand.u32 %v1060, 31
    %v1063 = vsub.s32 32, %v1062
    %v1064 = vshrl.u32 683565275, %v1063
    %v1065 = vshll.u32 683565275, %v1062
    %v1066 = vshrl.u32 2475754826, %v1063
    %v1067 = vor.u32 %v1065, %v1066
    %v1068 = vshll.u32 2475754826, %v1062
    %v1069 = vshrl.u32 2131351028, %v1063
    %v1070 = vor.u32 %v1068, %v1069
    %v1071 = vshll.u32 2131351028, %v1062
    %v1072 = vshrl.u32 2102212464, %v1063
    %v1073 = vor.u32 %v1071, %v1072
    %v1074 = vshll.u32 2102212464, %v1062
    %v1075 = vshrl.u32 920167782, %v1063
    %v1076 = vor.u32 %v1074, %v1075
    %v1077 = vshll.u32 920167782, %v1062
    %v1078 = vshrl.u32 1326507024, %v1063
    %v1079 = vor.u32 %v1077, %v1078
    %vm1080 = vcmp.lt.s32.totalorder %v1061, 1
    %vm1081 = vcmp.lt.s32.totalorder %v1061, 2
    %vm1082 = vcmp.lt.s32.totalorder %v1061, 3
    %vm1083 = vcmp.lt.s32.totalorder %v1061, 4
    %v1084 = vsel %vm1080, %v1064, %v1067
    %v1085 = vsel %vm1083, %v1073, 2102212464
    %v1086 = vsel %vm1082, %v1070, %v1085
    %v1087 = vsel %vm1081, %v1084, %v1086
    %v1088 = vsel %vm1080, %v1067, %v1070
    %v1089 = vsel %vm1083, %v1076, 920167782
    %v1090 = vsel %vm1082, %v1073, %v1089
    %v1091 = vsel %vm1081, %v1088, %v1090
    %v1092 = vsel %vm1080, %v1070, %v1073
    %v1093 = vsel %vm1083, %v1079, 1326507024
    %v1094 = vsel %vm1082, %v1076, %v1093
    %v1095 = vsel %vm1081, %v1092, %v1094
    %v1096 = vshll.u32 %v1056, 8
    %v1097 = vand.u32 %v1096, 65535
    %v1098 = vshrl.u32 %v1096, 16
    %v1099 = vand.u32 %v1095, 65535
    %v1100 = vshrl.u32 %v1095, 16
    %v1101 = vmul.u32 %v1097, %v1099
    %v1102 = vmul.u32 %v1097, %v1100
    %v1103 = vmul.u32 %v1098, %v1099
    %v1104 = vmul.u32 %v1098, %v1100
    %v1105 = vshll.u32 %v1102, 16
    %v1106 = vshrl.u32 %v1102, 16
    %v1107 = vshll.u32 %v1103, 16
    %v1108 = vshrl.u32 %v1103, 16
    %vm1109 = vc.u32 %v1101, %v1105
    %v1110 = vsel %vm1109, 1, 0
    %v1111 = vadd.s32 %v1101, %v1105
    %v1112 = vadd.s32 %v1104, %v1110
    %vm1113 = vc.u32 %v1111, %v1107
    %v1114 = vsel %vm1113, 1, 0
    %v1115 = vadd.s32 %v1111, %v1107
    %v1116 = vadd.s32 %v1112, %v1114
    %v1117 = vadd.s32 %v1116, %v1106
    %v1118 = vadd.s32 %v1117, %v1108
    %v1119 = vand.u32 %v1096, 65535
    %v1120 = vshrl.u32 %v1096, 16
    %v1121 = vand.u32 %v1091, 65535
    %v1122 = vshrl.u32 %v1091, 16
    %v1123 = vmul.u32 %v1119, %v1121
    %v1124 = vmul.u32 %v1119, %v1122
    %v1125 = vmul.u32 %v1120, %v1121
    %v1126 = vmul.u32 %v1120, %v1122
    %v1127 = vshll.u32 %v1124, 16
    %v1128 = vshrl.u32 %v1124, 16
    %v1129 = vshll.u32 %v1125, 16
    %v1130 = vshrl.u32 %v1125, 16
    %vm1131 = vc.u32 %v1123, %v1127
    %v1132 = vsel %vm1131, 1, 0
    %v1133 = vadd.s32 %v1123, %v1127
    %v1134 = vadd.s32 %v1126, %v1132
    %vm1135 = vc.u32 %v1133, %v1129
    %v1136 = vsel %vm1135, 1, 0
    %v1137 = vadd.s32 %v1133, %v1129
    %v1138 = vadd.s32 %v1134, %v1136
    %v1139 = vadd.s32 %v1138, %v1128
    %v1140 = vadd.s32 %v1139, %v1130
    %v1141 = vmul.u32 %v1096, %v1087
    %v1142 = vadd.s32 %v1118, %v1137
    %vm1143 = vc.u32 %v1118, %v1137
    %v1144 = vadd.s32 %v1140, 1
    %v1145 = vsel %vm1143, %v1144, %v1140
    %v1146 = vadd.s32 %v1141, %v1145
    %v1147 = vadd.s32 %v1146, 536870912
    %v1148 = vshrl.u32 %v1147, 30
    %v1149 = vshll.u32 %v1148, 30
    %v1150 = vsub.s32 %v1146, %v1149
    %vm1151 = vcmp.lt.s32.totalorder %v1150, 0
    %v1152 = vsub.s32 0, %v1150
    %v1153 = vsel %vm1151, %v1152, %v1150
    %v1154 = vclz %v1153
    %v1155 = vsub.s32 %v1154, 2
    %vm1156 = vcmp.gt.s32.totalorder 0, %v1155
    %v1157 = vsel %vm1156, 0, %v1155
    %v1158 = vsub.s32 32, %v1157
    %v1159 = vshll.u32 %v1150, %v1157
    %v1160 = vshrl.u32 %v1142, %v1158
    %v1161 = vor.u32 %v1159, %v1160
    %v1162 = vsub.s32 4294967266, %v1157
    %v1163 = vadd.s32 %v1162, 127
    %v1164 = vshll.u32 %v1163, 23
    %v1165 = vor.u32 4788187, %v1164
    %v1166 = vand.u32 2147483647, %v1165
    %v1168 = vcvt.s32.f32 %v1161
    %v1169 = vmul.f32 %v1168, %v1166
    %v1170 = vxor.u32 %v1169, 2147483648
    %v1171 = vsel %vm1050, %v1170, %v1169
    %v1172 = vsub.s32 4, %v1148
    %v1173 = vsel %vm1050, %v1172, %v1148
    %v1174 = vsel %vm1049, %v427, %v1171
    %v1175 = vsel %vm1049, 0, %v1173
    %v1176 = vmul.f32 %v1174, %v1174
    %v1177 = vmul.f32 %v1176, -0.001358992
    %v1178 = vadd.f32 %v1177, 0.041655596
    %v1179 = vmul.f32 %v1176, %v1178
    %v1180 = vadd.f32 %v1179, -0.4999988
    %v1181 = vmul.f32 %v1176, %v1180
    %v1182 = vadd.f32 1.0, %v1181
    %v1183 = vmul.f32 %v1174, %v1174
    %v1184 = vmul.f32 %v1183, -0.00019511016
    %v1185 = vadd.f32 %v1184, 0.008332121
    %v1186 = vmul.f32 %v1183, %v1185
    %v1187 = vadd.f32 %v1186, -0.16666654
    %v1188 = vmul.f32 %v1183, %v1187
    %v1189 = vadd.f32 %v1188, 1.0
    %v1190 = vmul.f32 %v1189, %v1174
    %vm1191 = vweird.f32 %v427
    %v1192 = vadd.s32 %v1175, 3
    %v1193 = vand.u32 %v1192, 3
    %vm1194 = vcmp.lt.s32.totalorder %v1193, 2
    %vm1195 = vcmp.eq.s32.totalorder %v1193, 0
    %v1196 = vxor.u32 %v1190, 2147483648
    %v1197 = vsel %vm1195, %v1182, %v1196
    %vm1198 = vcmp.eq.s32.totalorder %v1193, 2
    %v1199 = vxor.u32 %v1182, 2147483648
    %v1200 = vsel %vm1198, %v1199, %v1190
    %v1201 = vsel %vm1194, %v1197, %v1200
    %v1202 = vsel %vm1191, nan, %v1201
    %v1203 = vand.u32 2147483647, %v423
    %vm1204 = vcmp.le.f32.partialorder %v1203, 0.7853982
    %vm1205 = vcmp.lt.s32.totalorder %v423, 0
    %v1206 = vand.u32 %v423, 2139095040
    %v1207 = vshrl.u32 %v1206, 23
    %v1208 = vsub.s32 %v1207, 127
    %v1209 = vand.u32 2147483647, %v423
    %v1210 = vand.u32 %v1209, 8388607
    %v1211 = vor.u32 %v1210, 8388608
    %v1212 = vsub.s32 0, %v1211
    %v1213 = vadd.s32 %v1208, 1
    %vm1214 = vcmp.gt.s32.totalorder %v1213, 0
    %v1215 = vsel %vm1214, %v1213, 0
    %v1216 = vshrl.u32 %v1215, 5
    %v1217 = vand.u32 %v1215, 31
    %v1218 = vsub.s32 32, %v1217
    %v1219 = vshrl.u32 683565275, %v1218
    %v1220 = vshll.u32 683565275, %v1217
    %v1221 = vshrl.u32 2475754826, %v1218
    %v1222 = vor.u32 %v1220, %v1221
    %v1223 = vshll.u32 2475754826, %v1217
    %v1224 = vshrl.u32 2131351028, %v1218
    %v1225 = vor.u32 %v1223, %v1224
    %v1226 = vshll.u32 2131351028, %v1217
    %v1227 = vshrl.u32 2102212464, %v1218
    %v1228 = vor.u32 %v1226, %v1227
    %v1229 = vshll.u32 2102212464, %v1217
    %v1230 = vshrl.u32 920167782, %v1218
    %v1231 = vor.u32 %v1229, %v1230
    %v1232 = vshll.u32 920167782, %v1217
    %v1233 = vshrl.u32 1326507024, %v1218
    %v1234 = vor.u32 %v1232, %v1233
    %vm1235 = vcmp.lt.s32.totalorder %v1216, 1
    %vm1236 = vcmp.lt.s32.totalorder %v1216, 2
    %vm1237 = vcmp.lt.s32.totalorder %v1216, 3
    %vm1238 = vcmp.lt.s32.totalorder %v1216, 4
    %v1239 = vsel %vm1235, %v1219, %v1222
    %v1240 = vsel %vm1238, %v1228, 2102212464
    %v1241 = vsel %vm1237, %v1225, %v1240
    %v1242 = vsel %vm1236, %v1239, %v1241
    %v1243 = vsel %vm1235, %v1222, %v1225
    %v1244 = vsel %vm1238, %v1231, 920167782
    %v1245 = vsel %vm1237, %v1228, %v1244
    %v1246 = vsel %vm1236, %v1243, %v1245
    %v1247 = vsel %vm1235, %v1225, %v1228
    %v1248 = vsel %vm1238, %v1234, 1326507024
    %v1249 = vsel %vm1237, %v1231, %v1248
    %v1250 = vsel %vm1236, %v1247, %v1249
    %v1251 = vshll.u32 %v1211, 8
    %v1252 = vand.u32 %v1251, 65535
    %v1253 = vshrl.u32 %v1251, 16
    %v1254 = vand.u32 %v1250, 65535
    %v1255 = vshrl.u32 %v1250, 16
    %v1256 = vmul.u32 %v1252, %v1254
    %v1257 = vmul.u32 %v1252, %v1255
    %v1258 = vmul.u32 %v1253, %v1254
    %v1259 = vmul.u32 %v1253, %v1255
    %v1260 = vshll.u32 %v1257, 16
    %v1261 = vshrl.u32 %v1257, 16
    %v1262 = vshll.u32 %v1258, 16
    %v1263 = vshrl.u32 %v1258, 16
    %vm1264 = vc.u32 %v1256, %v1260
    %v1265 = vsel %vm1264, 1, 0
    %v1266 = vadd.s32 %v1256, %v1260
    %v1267 = vadd.s32 %v1259, %v1265
    %vm1268 = vc.u32 %v1266, %v1262
    %v1269 = vsel %vm1268, 1, 0
    %v1270 = vadd.s32 %v1266, %v1262
    %v1271 = vadd.s32 %v1267, %v1269
    %v1272 = vadd.s32 %v1271, %v1261
    %v1273 = vadd.s32 %v1272, %v1263
    %v1274 = vand.u32 %v1251, 65535
    %v1275 = vshrl.u32 %v1251, 16
    %v1276 = vand.u32 %v1246, 65535
    %v1277 = vshrl.u32 %v1246, 16
    %v1278 = vmul.u32 %v1274, %v1276
    %v1279 = vmul.u32 %v1274, %v1277
    %v1280 = vmul.u32 %v1275, %v1276
    %v1281 = vmul.u32 %v1275, %v1277
    %v1282 = vshll.u32 %v1279, 16
    %v1283 = vshrl.u32 %v1279, 16
    %v1284 = vshll.u32 %v1280, 16
    %v1285 = vshrl.u32 %v1280, 16
    %vm1286 = vc.u32 %v1278, %v1282
    %v1287 = vsel %vm1286, 1, 0
    %v1288 = vadd.s32 %v1278, %v1282
    %v1289 = vadd.s32 %v1281, %v1287
    %vm1290 = vc.u32 %v1288, %v1284
    %v1291 = vsel %vm1290, 1, 0
    %v1292 = vadd.s32 %v1288, %v1284
    %v1293 = vadd.s32 %v1289, %v1291
    %v1294 = vadd.s32 %v1293, %v1283
    %v1295 = vadd.s32 %v1294, %v1285
    %v1296 = vmul.u32 %v1251, %v1242
    %v1297 = vadd.s32 %v1273, %v1292
    %vm1298 = vc.u32 %v1273, %v1292
    %v1299 = vadd.s32 %v1295, 1
    %v1300 = vsel %vm1298, %v1299, %v1295
    %v1301 = vadd.s32 %v1296, %v1300
    %v1302 = vadd.s32 %v1301, 536870912
    %v1303 = vshrl.u32 %v1302, 30
    %v1304 = vshll.u32 %v1303, 30
    %v1305 = vsub.s32 %v1301, %v1304
    %vm1306 = vcmp.lt.s32.totalorder %v1305, 0
    %v1307 = vsub.s32 0, %v1305
    %v1308 = vsel %vm1306, %v1307, %v1305
    %v1309 = vclz %v1308
    %v1310 = vsub.s32 %v1309, 2
    %vm1311 = vcmp.gt.s32.totalorder 0, %v1310
    %v1312 = vsel %vm1311, 0, %v1310
    %v1313 = vsub.s32 32, %v1312
    %v1314 = vshll.u32 %v1305, %v1312
    %v1315 = vshrl.u32 %v1297, %v1313
    %v1316 = vor.u32 %v1314, %v1315
    %v1317 = vsub.s32 4294967266, %v1312
    %v1318 = vadd.s32 %v1317, 127
    %v1319 = vshll.u32 %v1318, 23
    %v1320 = vor.u32 4788187, %v1319
    %v1321 = vand.u32 2147483647, %v1320
    %v1323 = vcvt.s32.f32 %v1316
    %v1324 = vmul.f32 %v1323, %v1321
    %v1325 = vxor.u32 %v1324, 2147483648
    %v1326 = vsel %vm1205, %v1325, %v1324
    %v1327 = vsub.s32 4, %v1303
    %v1328 = vsel %vm1205, %v1327, %v1303
    %v1329 = vsel %vm1204, %v423, %v1326
    %v1330 = vsel %vm1204, 0, %v1328
    %v1331 = vmul.f32 %v1329, %v1329
    %v1332 = vmul.f32 %v1331, -0.001358992
    %v1333 = vadd.f32 %v1332, 0.041655596
    %v1334 = vmul.f32 %v1331, %v1333
    %v1335 = vadd.f32 %v1334, -0.4999988
    %v1336 = vmul.f32 %v1331, %v1335
    %v1337 = vadd.f32 1.0, %v1336
    %v1338 = vmul.f32 %v1329, %v1329
    %v1339 = vmul.f32 %v1338, -0.00019511016
    %v1340 = vadd.f32 %v1339, 0.008332121
    %v1341 = vmul.f32 %v1338, %v1340
    %v1342 = vadd.f32 %v1341, -0.16666654
    %v1343 = vmul.f32 %v1338, %v1342
    %v1344 = vadd.f32 %v1343, 1.0
    %v1345 = vmul.f32 %v1344, %v1329
    %vm1346 = vweird.f32 %v423
    %v1347 = vand.u32 %v1330, 3
    %vm1348 = vcmp.lt.s32.totalorder %v1347, 2
    %vm1349 = vcmp.eq.s32.totalorder %v1347, 0
    %v1350 = vxor.u32 %v1345, 2147483648
    %v1351 = vsel %vm1349, %v1337, %v1350
    %vm1352 = vcmp.eq.s32.totalorder %v1347, 2
    %v1353 = vxor.u32 %v1337, 2147483648
    %v1354 = vsel %vm1352, %v1353, %v1345
    %v1355 = vsel %vm1348, %v1351, %v1354
    %v1356 = vsel %vm1346, nan, %v1355
    %v1357 = vand.u32 2147483647, %v424
    %vm1358 = vcmp.le.f32.partialorder %v1357, 0.7853982
    %vm1359 = vcmp.lt.s32.totalorder %v424, 0
    %v1360 = vand.u32 %v424, 2139095040
    %v1361 = vshrl.u32 %v1360, 23
    %v1362 = vsub.s32 %v1361, 127
    %v1363 = vand.u32 2147483647, %v424
    %v1364 = vand.u32 %v1363, 8388607
    %v1365 = vor.u32 %v1364, 8388608
    %v1366 = vsub.s32 0, %v1365
    %v1367 = vadd.s32 %v1362, 1
    %vm1368 = vcmp.gt.s32.totalorder %v1367, 0
    %v1369 = vsel %vm1368, %v1367, 0
    %v1370 = vshrl.u32 %v1369, 5
    %v1371 = vand.u32 %v1369, 31
    %v1372 = vsub.s32 32, %v1371
    %v1373 = vshrl.u32 683565275, %v1372
    %v1374 = vshll.u32 683565275, %v1371
    %v1375 = vshrl.u32 2475754826, %v1372
    %v1376 = vor.u32 %v1374, %v1375
    %v1377 = vshll.u32 2475754826, %v1371
    %v1378 = vshrl.u32 2131351028, %v1372
    %v1379 = vor.u32 %v1377, %v1378
    %v1380 = vshll.u32 2131351028, %v1371
    %v1381 = vshrl.u32 2102212464, %v1372
    %v1382 = vor.u32 %v1380, %v1381
    %v1383 = vshll.u32 2102212464, %v1371
    %v1384 = vshrl.u32 920167782, %v1372
    %v1385 = vor.u32 %v1383, %v1384
    %v1386 = vshll.u32 920167782, %v1371
    %v1387 = vshrl.u32 1326507024, %v1372
    %v1388 = vor.u32 %v1386, %v1387
    %vm1389 = vcmp.lt.s32.totalorder %v1370, 1
    %vm1390 = vcmp.lt.s32.totalorder %v1370, 2
    %vm1391 = vcmp.lt.s32.totalorder %v1370, 3
    %vm1392 = vcmp.lt.s32.totalorder %v1370, 4
    %v1393 = vsel %vm1389, %v1373, %v1376
    %v1394 = vsel %vm1392, %v1382, 2102212464
    %v1395 = vsel %vm1391, %v1379, %v1394
    %v1396 = vsel %vm1390, %v1393, %v1395
    %v1397 = vsel %vm1389, %v1376, %v1379
    %v1398 = vsel %vm1392, %v1385, 920167782
    %v1399 = vsel %vm1391, %v1382, %v1398
    %v1400 = vsel %vm1390, %v1397, %v1399
    %v1401 = vsel %vm1389, %v1379, %v1382
    %v1402 = vsel %vm1392, %v1388, 1326507024
    %v1403 = vsel %vm1391, %v1385, %v1402
    %v1404 = vsel %vm1390, %v1401, %v1403
    %v1405 = vshll.u32 %v1365, 8
    %v1406 = vand.u32 %v1405, 65535
    %v1407 = vshrl.u32 %v1405, 16
    %v1408 = vand.u32 %v1404, 65535
    %v1409 = vshrl.u32 %v1404, 16
    %v1410 = vmul.u32 %v1406, %v1408
    %v1411 = vmul.u32 %v1406, %v1409
    %v1412 = vmul.u32 %v1407, %v1408
    %v1413 = vmul.u32 %v1407, %v1409
    %v1414 = vshll.u32 %v1411, 16
    %v1415 = vshrl.u32 %v1411, 16
    %v1416 = vshll.u32 %v1412, 16
    %v1417 = vshrl.u32 %v1412, 16
    %vm1418 = vc.u32 %v1410, %v1414
    %v1419 = vsel %vm1418, 1, 0
    %v1420 = vadd.s32 %v1410, %v1414
    %v1421 = vadd.s32 %v1413, %v1419
    %vm1422 = vc.u32 %v1420, %v1416
    %v1423 = vsel %vm1422, 1, 0
    %v1424 = vadd.s32 %v1420, %v1416
    %v1425 = vadd.s32 %v1421, %v1423
    %v1426 = vadd.s32 %v1425, %v1415
    %v1427 = vadd.s32 %v1426, %v1417
    %v1428 = vand.u32 %v1405, 65535
    %v1429 = vshrl.u32 %v1405, 16
    %v1430 = vand.u32 %v1400, 65535
    %v1431 = vshrl.u32 %v1400, 16
    %v1432 = vmul.u32 %v1428, %v1430
    %v1433 = vmul.u32 %v1428, %v1431
    %v1434 = vmul.u32 %v1429, %v1430
    %v1435 = vmul.u32 %v1429, %v1431
    %v1436 = vshll.u32 %v1433, 16
    %v1437 = vshrl.u32 %v1433, 16
    %v1438 = vshll.u32 %v1434, 16
    %v1439 = vshrl.u32 %v1434, 16
    %vm1440 = vc.u32 %v1432, %v1436
    %v1441 = vsel %vm1440, 1, 0
    %v1442 = vadd.s32 %v1432, %v1436
    %v1443 = vadd.s32 %v1435, %v1441
    %vm1444 = vc.u32 %v1442, %v1438
    %v1445 = vsel %vm1444, 1, 0
    %v1446 = vadd.s32 %v1442, %v1438
    %v1447 = vadd.s32 %v1443, %v1445
    %v1448 = vadd.s32 %v1447, %v1437
    %v1449 = vadd.s32 %v1448, %v1439
    %v1450 = vmul.u32 %v1405, %v1396
    %v1451 = vadd.s32 %v1427, %v1446
    %vm1452 = vc.u32 %v1427, %v1446
    %v1453 = vadd.s32 %v1449, 1
    %v1454 = vsel %vm1452, %v1453, %v1449
    %v1455 = vadd.s32 %v1450, %v1454
    %v1456 = vadd.s32 %v1455, 536870912
    %v1457 = vshrl.u32 %v1456, 30
    %v1458 = vshll.u32 %v1457, 30
    %v1459 = vsub.s32 %v1455, %v1458
    %vm1460 = vcmp.lt.s32.totalorder %v1459, 0
    %v1461 = vsub.s32 0, %v1459
    %v1462 = vsel %vm1460, %v1461, %v1459
    %v1463 = vclz %v1462
    %v1464 = vsub.s32 %v1463, 2
    %vm1465 = vcmp.gt.s32.totalorder 0, %v1464
    %v1466 = vsel %vm1465, 0, %v1464
    %v1467 = vsub.s32 32, %v1466
    %v1468 = vshll.u32 %v1459, %v1466
    %v1469 = vshrl.u32 %v1451, %v1467
    %v1470 = vor.u32 %v1468, %v1469
    %v1471 = vsub.s32 4294967266, %v1466
    %v1472 = vadd.s32 %v1471, 127
    %v1473 = vshll.u32 %v1472, 23
    %v1474 = vor.u32 4788187, %v1473
    %v1475 = vand.u32 2147483647, %v1474
    %v1477 = vcvt.s32.f32 %v1470
    %v1478 = vmul.f32 %v1477, %v1475
    %v1479 = vxor.u32 %v1478, 2147483648
    %v1480 = vsel %vm1359, %v1479, %v1478
    %v1481 = vsub.s32 4, %v1457
    %v1482 = vsel %vm1359, %v1481, %v1457
    %v1483 = vsel %vm1358, %v424, %v1480
    %v1484 = vsel %vm1358, 0, %v1482
    %v1485 = vmul.f32 %v1483, %v1483
    %v1486 = vmul.f32 %v1485, -0.001358992
    %v1487 = vadd.f32 %v1486, 0.041655596
    %v1488 = vmul.f32 %v1485, %v1487
    %v1489 = vadd.f32 %v1488, -0.4999988
    %v1490 = vmul.f32 %v1485, %v1489
    %v1491 = vadd.f32 1.0, %v1490
    %v1492 = vmul.f32 %v1483, %v1483
    %v1493 = vmul.f32 %v1492, -0.00019511016
    %v1494 = vadd.f32 %v1493, 0.008332121
    %v1495 = vmul.f32 %v1492, %v1494
    %v1496 = vadd.f32 %v1495, -0.16666654
    %v1497 = vmul.f32 %v1492, %v1496
    %v1498 = vadd.f32 %v1497, 1.0
    %v1499 = vmul.f32 %v1498, %v1483
    %vm1500 = vweird.f32 %v424
    %v1501 = vand.u32 %v1484, 3
    %vm1502 = vcmp.lt.s32.totalorder %v1501, 2
    %vm1503 = vcmp.eq.s32.totalorder %v1501, 0
    %v1504 = vxor.u32 %v1499, 2147483648
    %v1505 = vsel %vm1503, %v1491, %v1504
    %vm1506 = vcmp.eq.s32.totalorder %v1501, 2
    %v1507 = vxor.u32 %v1491, 2147483648
    %v1508 = vsel %vm1506, %v1507, %v1499
    %v1509 = vsel %vm1502, %v1505, %v1508
    %v1510 = vsel %vm1500, nan, %v1509
    %v1511 = vand.u32 2147483647, %v425
    %vm1512 = vcmp.le.f32.partialorder %v1511, 0.7853982
    %vm1513 = vcmp.lt.s32.totalorder %v425, 0
    %v1514 = vand.u32 %v425, 2139095040
    %v1515 = vshrl.u32 %v1514, 23
    %v1516 = vsub.s32 %v1515, 127
    %v1517 = vand.u32 2147483647, %v425
    %v1518 = vand.u32 %v1517, 8388607
    %v1519 = vor.u32 %v1518, 8388608
    %v1520 = vsub.s32 0, %v1519
    %v1521 = vadd.s32 %v1516, 1
    %vm1522 = vcmp.gt.s32.totalorder %v1521, 0
    %v1523 = vsel %vm1522, %v1521, 0
    %v1524 = vshrl.u32 %v1523, 5
    %v1525 = vand.u32 %v1523, 31
    %v1526 = vsub.s32 32, %v1525
    %v1527 = vshrl.u32 683565275, %v1526
    %v1528 = vshll.u32 683565275, %v1525
    %v1529 = vshrl.u32 2475754826, %v1526
    %v1530 = vor.u32 %v1528, %v1529
    %v1531 = vshll.u32 2475754826, %v1525
    %v1532 = vshrl.u32 2131351028, %v1526
    %v1533 = vor.u32 %v1531, %v1532
    %v1534 = vshll.u32 2131351028, %v1525
    %v1535 = vshrl.u32 2102212464, %v1526
    %v1536 = vor.u32 %v1534, %v1535
    %v1537 = vshll.u32 2102212464, %v1525
    %v1538 = vshrl.u32 920167782, %v1526
    %v1539 = vor.u32 %v1537, %v1538
    %v1540 = vshll.u32 920167782, %v1525
    %v1541 = vshrl.u32 1326507024, %v1526
    %v1542 = vor.u32 %v1540, %v1541
    %vm1543 = vcmp.lt.s32.totalorder %v1524, 1
    %vm1544 = vcmp.lt.s32.totalorder %v1524, 2
    %vm1545 = vcmp.lt.s32.totalorder %v1524, 3
    %vm1546 = vcmp.lt.s32.totalorder %v1524, 4
    %v1547 = vsel %vm1543, %v1527, %v1530
    %v1548 = vsel %vm1546, %v1536, 2102212464
    %v1549 = vsel %vm1545, %v1533, %v1548
    %v1550 = vsel %vm1544, %v1547, %v1549
    %v1551 = vsel %vm1543, %v1530, %v1533
    %v1552 = vsel %vm1546, %v1539, 920167782
    %v1553 = vsel %vm1545, %v1536, %v1552
    %v1554 = vsel %vm1544, %v1551, %v1553
    %v1555 = vsel %vm1543, %v1533, %v1536
    %v1556 = vsel %vm1546, %v1542, 1326507024
    %v1557 = vsel %vm1545, %v1539, %v1556
    %v1558 = vsel %vm1544, %v1555, %v1557
    %v1559 = vshll.u32 %v1519, 8
    %v1560 = vand.u32 %v1559, 65535
    %v1561 = vshrl.u32 %v1559, 16
    %v1562 = vand.u32 %v1558, 65535
    %v1563 = vshrl.u32 %v1558, 16
    %v1564 = vmul.u32 %v1560, %v1562
    %v1565 = vmul.u32 %v1560, %v1563
    %v1566 = vmul.u32 %v1561, %v1562
    %v1567 = vmul.u32 %v1561, %v1563
    %v1568 = vshll.u32 %v1565, 16
    %v1569 = vshrl.u32 %v1565, 16
    %v1570 = vshll.u32 %v1566, 16
    %v1571 = vshrl.u32 %v1566, 16
    %vm1572 = vc.u32 %v1564, %v1568
    %v1573 = vsel %vm1572, 1, 0
    %v1574 = vadd.s32 %v1564, %v1568
    %v1575 = vadd.s32 %v1567, %v1573
    %vm1576 = vc.u32 %v1574, %v1570
    %v1577 = vsel %vm1576, 1, 0
    %v1578 = vadd.s32 %v1574, %v1570
    %v1579 = vadd.s32 %v1575, %v1577
    %v1580 = vadd.s32 %v1579, %v1569
    %v1581 = vadd.s32 %v1580, %v1571
    %v1582 = vand.u32 %v1559, 65535
    %v1583 = vshrl.u32 %v1559, 16
    %v1584 = vand.u32 %v1554, 65535
    %v1585 = vshrl.u32 %v1554, 16
    %v1586 = vmul.u32 %v1582, %v1584
    %v1587 = vmul.u32 %v1582, %v1585
    %v1588 = vmul.u32 %v1583, %v1584
    %v1589 = vmul.u32 %v1583, %v1585
    %v1590 = vshll.u32 %v1587, 16
    %v1591 = vshrl.u32 %v1587, 16
    %v1592 = vshll.u32 %v1588, 16
    %v1593 = vshrl.u32 %v1588, 16
    %vm1594 = vc.u32 %v1586, %v1590
    %v1595 = vsel %vm1594, 1, 0
    %v1596 = vadd.s32 %v1586, %v1590
    %v1597 = vadd.s32 %v1589, %v1595
    %vm1598 = vc.u32 %v1596, %v1592
    %v1599 = vsel %vm1598, 1, 0
    %v1600 = vadd.s32 %v1596, %v1592
    %v1601 = vadd.s32 %v1597, %v1599
    %v1602 = vadd.s32 %v1601, %v1591
    %v1603 = vadd.s32 %v1602, %v1593
    %v1604 = vmul.u32 %v1559, %v1550
    %v1605 = vadd.s32 %v1581, %v1600
    %vm1606 = vc.u32 %v1581, %v1600
    %v1607 = vadd.s32 %v1603, 1
    %v1608 = vsel %vm1606, %v1607, %v1603
    %v1609 = vadd.s32 %v1604, %v1608
    %v1610 = vadd.s32 %v1609, 536870912
    %v1611 = vshrl.u32 %v1610, 30
    %v1612 = vshll.u32 %v1611, 30
    %v1613 = vsub.s32 %v1609, %v1612
    %vm1614 = vcmp.lt.s32.totalorder %v1613, 0
    %v1615 = vsub.s32 0, %v1613
    %v1616 = vsel %vm1614, %v1615, %v1613
    %v1617 = vclz %v1616
    %v1618 = vsub.s32 %v1617, 2
    %vm1619 = vcmp.gt.s32.totalorder 0, %v1618
    %v1620 = vsel %vm1619, 0, %v1618
    %v1621 = vsub.s32 32, %v1620
    %v1622 = vshll.u32 %v1613, %v1620
    %v1623 = vshrl.u32 %v1605, %v1621
    %v1624 = vor.u32 %v1622, %v1623
    %v1625 = vsub.s32 4294967266, %v1620
    %v1626 = vadd.s32 %v1625, 127
    %v1627 = vshll.u32 %v1626, 23
    %v1628 = vor.u32 4788187, %v1627
    %v1629 = vand.u32 2147483647, %v1628
    %v1631 = vcvt.s32.f32 %v1624
    %v1632 = vmul.f32 %v1631, %v1629
    %v1633 = vxor.u32 %v1632, 2147483648
    %v1634 = vsel %vm1513, %v1633, %v1632
    %v1635 = vsub.s32 4, %v1611
    %v1636 = vsel %vm1513, %v1635, %v1611
    %v1637 = vsel %vm1512, %v425, %v1634
    %v1638 = vsel %vm1512, 0, %v1636
    %v1639 = vmul.f32 %v1637, %v1637
    %v1640 = vmul.f32 %v1639, -0.001358992
    %v1641 = vadd.f32 %v1640, 0.041655596
    %v1642 = vmul.f32 %v1639, %v1641
    %v1643 = vadd.f32 %v1642, -0.4999988
    %v1644 = vmul.f32 %v1639, %v1643
    %v1645 = vadd.f32 1.0, %v1644
    %v1646 = vmul.f32 %v1637, %v1637
    %v1647 = vmul.f32 %v1646, -0.00019511016
    %v1648 = vadd.f32 %v1647, 0.008332121
    %v1649 = vmul.f32 %v1646, %v1648
    %v1650 = vadd.f32 %v1649, -0.16666654
    %v1651 = vmul.f32 %v1646, %v1650
    %v1652 = vadd.f32 %v1651, 1.0
    %v1653 = vmul.f32 %v1652, %v1637
    %vm1654 = vweird.f32 %v425
    %v1655 = vand.u32 %v1638, 3
    %vm1656 = vcmp.lt.s32.totalorder %v1655, 2
    %vm1657 = vcmp.eq.s32.totalorder %v1655, 0
    %v1658 = vxor.u32 %v1653, 2147483648
    %v1659 = vsel %vm1657, %v1645, %v1658
    %vm1660 = vcmp.eq.s32.totalorder %v1655, 2
    %v1661 = vxor.u32 %v1645, 2147483648
    %v1662 = vsel %vm1660, %v1661, %v1653
    %v1663 = vsel %vm1656, %v1659, %v1662
    %v1664 = vsel %vm1654, nan, %v1663
    %v1665 = vand.u32 2147483647, %v426
    %vm1666 = vcmp.le.f32.partialorder %v1665, 0.7853982
    %vm1667 = vcmp.lt.s32.totalorder %v426, 0
    %v1668 = vand.u32 %v426, 2139095040
    %v1669 = vshrl.u32 %v1668, 23
    %v1670 = vsub.s32 %v1669, 127
    %v1671 = vand.u32 2147483647, %v426
    %v1672 = vand.u32 %v1671, 8388607
    %v1673 = vor.u32 %v1672, 8388608
    %v1674 = vsub.s32 0, %v1673
    %v1675 = vadd.s32 %v1670, 1
    %vm1676 = vcmp.gt.s32.totalorder %v1675, 0
    %v1677 = vsel %vm1676, %v1675, 0
    %v1678 = vshrl.u32 %v1677, 5
    %v1679 = vand.u32 %v1677, 31
    %v1680 = vsub.s32 32, %v1679
    %v1681 = vshrl.u32 683565275, %v1680
    %v1682 = vshll.u32 683565275, %v1679
    %v1683 = vshrl.u32 2475754826, %v1680
    %v1684 = vor.u32 %v1682, %v1683
    %v1685 = vshll.u32 2475754826, %v1679
    %v1686 = vshrl.u32 2131351028, %v1680
    %v1687 = vor.u32 %v1685, %v1686
    %v1688 = vshll.u32 2131351028, %v1679
    %v1689 = vshrl.u32 2102212464, %v1680
    %v1690 = vor.u32 %v1688, %v1689
    %v1691 = vshll.u32 2102212464, %v1679
    %v1692 = vshrl.u32 920167782, %v1680
    %v1693 = vor.u32 %v1691, %v1692
    %v1694 = vshll.u32 920167782, %v1679
    %v1695 = vshrl.u32 1326507024, %v1680
    %v1696 = vor.u32 %v1694, %v1695
    %vm1697 = vcmp.lt.s32.totalorder %v1678, 1
    %vm1698 = vcmp.lt.s32.totalorder %v1678, 2
    %vm1699 = vcmp.lt.s32.totalorder %v1678, 3
    %vm1700 = vcmp.lt.s32.totalorder %v1678, 4
    %v1701 = vsel %vm1697, %v1681, %v1684
    %v1702 = vsel %vm1700, %v1690, 2102212464
    %v1703 = vsel %vm1699, %v1687, %v1702
    %v1704 = vsel %vm1698, %v1701, %v1703
    %v1705 = vsel %vm1697, %v1684, %v1687
    %v1706 = vsel %vm1700, %v1693, 920167782
    %v1707 = vsel %vm1699, %v1690, %v1706
    %v1708 = vsel %vm1698, %v1705, %v1707
    %v1709 = vsel %vm1697, %v1687, %v1690
    %v1710 = vsel %vm1700, %v1696, 1326507024
    %v1711 = vsel %vm1699, %v1693, %v1710
    %v1712 = vsel %vm1698, %v1709, %v1711
    %v1713 = vshll.u32 %v1673, 8
    %v1714 = vand.u32 %v1713, 65535
    %v1715 = vshrl.u32 %v1713, 16
    %v1716 = vand.u32 %v1712, 65535
    %v1717 = vshrl.u32 %v1712, 16
    %v1718 = vmul.u32 %v1714, %v1716
    %v1719 = vmul.u32 %v1714, %v1717
    %v1720 = vmul.u32 %v1715, %v1716
    %v1721 = vmul.u32 %v1715, %v1717
    %v1722 = vshll.u32 %v1719, 16
    %v1723 = vshrl.u32 %v1719, 16
    %v1724 = vshll.u32 %v1720, 16
    %v1725 = vshrl.u32 %v1720, 16
    %vm1726 = vc.u32 %v1718, %v1722
    %v1727 = vsel %vm1726, 1, 0
    %v1728 = vadd.s32 %v1718, %v1722
    %v1729 = vadd.s32 %v1721, %v1727
    %vm1730 = vc.u32 %v1728, %v1724
    %v1731 = vsel %vm1730, 1, 0
    %v1732 = vadd.s32 %v1728, %v1724
    %v1733 = vadd.s32 %v1729, %v1731
    %v1734 = vadd.s32 %v1733, %v1723
    %v1735 = vadd.s32 %v1734, %v1725
    %v1736 = vand.u32 %v1713, 65535
    %v1737 = vshrl.u32 %v1713, 16
    %v1738 = vand.u32 %v1708, 65535
    %v1739 = vshrl.u32 %v1708, 16
    %v1740 = vmul.u32 %v1736, %v1738
    %v1741 = vmul.u32 %v1736, %v1739
    %v1742 = vmul.u32 %v1737, %v1738
    %v1743 = vmul.u32 %v1737, %v1739
    %v1744 = vshll.u32 %v1741, 16
    %v1745 = vshrl.u32 %v1741, 16
    %v1746 = vshll.u32 %v1742, 16
    %v1747 = vshrl.u32 %v1742, 16
    %vm1748 = vc.u32 %v1740, %v1744
    %v1749 = vsel %vm1748, 1, 0
    %v1750 = vadd.s32 %v1740, %v1744
    %v1751 = vadd.s32 %v1743, %v1749
    %vm1752 = vc.u32 %v1750, %v1746
    %v1753 = vsel %vm1752, 1, 0
    %v1754 = vadd.s32 %v1750, %v1746
    %v1755 = vadd.s32 %v1751, %v1753
    %v1756 = vadd.s32 %v1755, %v1745
    %v1757 = vadd.s32 %v1756, %v1747
    %v1758 = vmul.u32 %v1713, %v1704
    %v1759 = vadd.s32 %v1735, %v1754
    %vm1760 = vc.u32 %v1735, %v1754
    %v1761 = vadd.s32 %v1757, 1
    %v1762 = vsel %vm1760, %v1761, %v1757
    %v1763 = vadd.s32 %v1758, %v1762
    %v1764 = vadd.s32 %v1763, 536870912
    %v1765 = vshrl.u32 %v1764, 30
    %v1766 = vshll.u32 %v1765, 30
    %v1767 = vsub.s32 %v1763, %v1766
    %vm1768 = vcmp.lt.s32.totalorder %v1767, 0
    %v1769 = vsub.s32 0, %v1767
    %v1770 = vsel %vm1768, %v1769, %v1767
    %v1771 = vclz %v1770
    %v1772 = vsub.s32 %v1771, 2
    %vm1773 = vcmp.gt.s32.totalorder 0, %v1772
    %v1774 = vsel %vm1773, 0, %v1772
    %v1775 = vsub.s32 32, %v1774
    %v1776 = vshll.u32 %v1767, %v1774
    %v1777 = vshrl.u32 %v1759, %v1775
    %v1778 = vor.u32 %v1776, %v1777
    %v1779 = vsub.s32 4294967266, %v1774
    %v1780 = vadd.s32 %v1779, 127
    %v1781 = vshll.u32 %v1780, 23
    %v1782 = vor.u32 4788187, %v1781
    %v1783 = vand.u32 2147483647, %v1782
    %v1785 = vcvt.s32.f32 %v1778
    %v1786 = vmul.f32 %v1785, %v1783
    %v1787 = vxor.u32 %v1786, 2147483648
    %v1788 = vsel %vm1667, %v1787, %v1786
    %v1789 = vsub.s32 4, %v1765
    %v1790 = vsel %vm1667, %v1789, %v1765
    %v1791 = vsel %vm1666, %v426, %v1788
    %v1792 = vsel %vm1666, 0, %v1790
    %v1793 = vmul.f32 %v1791, %v1791
    %v1794 = vmul.f32 %v1793, -0.001358992
    %v1795 = vadd.f32 %v1794, 0.041655596
    %v1796 = vmul.f32 %v1793, %v1795
    %v1797 = vadd.f32 %v1796, -0.4999988
    %v1798 = vmul.f32 %v1793, %v1797
    %v1799 = vadd.f32 1.0, %v1798
    %v1800 = vmul.f32 %v1791, %v1791
    %v1801 = vmul.f32 %v1800, -0.00019511016
    %v1802 = vadd.f32 %v1801, 0.008332121
    %v1803 = vmul.f32 %v1800, %v1802
    %v1804 = vadd.f32 %v1803, -0.16666654
    %v1805 = vmul.f32 %v1800, %v1804
    %v1806 = vadd.f32 %v1805, 1.0
    %v1807 = vmul.f32 %v1806, %v1791
    %vm1808 = vweird.f32 %v426
    %v1809 = vand.u32 %v1792, 3
    %vm1810 = vcmp.lt.s32.totalorder %v1809, 2
    %vm1811 = vcmp.eq.s32.totalorder %v1809, 0
    %v1812 = vxor.u32 %v1807, 2147483648
    %v1813 = vsel %vm1811, %v1799, %v1812
    %vm1814 = vcmp.eq.s32.totalorder %v1809, 2
    %v1815 = vxor.u32 %v1799, 2147483648
    %v1816 = vsel %vm1814, %v1815, %v1807
    %v1817 = vsel %vm1810, %v1813, %v1816
    %v1818 = vsel %vm1808, nan, %v1817
    %v1819 = vand.u32 2147483647, %v427
    %vm1820 = vcmp.le.f32.partialorder %v1819, 0.7853982
    %vm1821 = vcmp.lt.s32.totalorder %v427, 0
    %v1822 = vand.u32 %v427, 2139095040
    %v1823 = vshrl.u32 %v1822, 23
    %v1824 = vsub.s32 %v1823, 127
    %v1825 = vand.u32 2147483647, %v427
    %v1826 = vand.u32 %v1825, 8388607
    %v1827 = vor.u32 %v1826, 8388608
    %v1828 = vsub.s32 0, %v1827
    %v1829 = vadd.s32 %v1824, 1
    %vm1830 = vcmp.gt.s32.totalorder %v1829, 0
    %v1831 = vsel %vm1830, %v1829, 0
    %v1832 = vshrl.u32 %v1831, 5
    %v1833 = vand.u32 %v1831, 31
    %v1834 = vsub.s32 32, %v1833
    %v1835 = vshrl.u32 683565275, %v1834
    %v1836 = vshll.u32 683565275, %v1833
    %v1837 = vshrl.u32 2475754826, %v1834
    %v1838 = vor.u32 %v1836, %v1837
    %v1839 = vshll.u32 2475754826, %v1833
    %v1840 = vshrl.u32 2131351028, %v1834
    %v1841 = vor.u32 %v1839, %v1840
    %v1842 = vshll.u32 2131351028, %v1833
    %v1843 = vshrl.u32 2102212464, %v1834
    %v1844 = vor.u32 %v1842, %v1843
    %v1845 = vshll.u32 2102212464, %v1833
    %v1846 = vshrl.u32 920167782, %v1834
    %v1847 = vor.u32 %v1845, %v1846
    %v1848 = vshll.u32 920167782, %v1833
    %v1849 = vshrl.u32 1326507024, %v1834
    %v1850 = vor.u32 %v1848, %v1849
    %vm1851 = vcmp.lt.s32.totalorder %v1832, 1
    %vm1852 = vcmp.lt.s32.totalorder %v1832, 2
    %vm1853 = vcmp.lt.s32.totalorder %v1832, 3
    %vm1854 = vcmp.lt.s32.totalorder %v1832, 4
    %v1855 = vsel %vm1851, %v1835, %v1838
    %v1856 = vsel %vm1854, %v1844, 2102212464
    %v1857 = vsel %vm1853, %v1841, %v1856
    %v1858 = vsel %vm1852, %v1855, %v1857
    %v1859 = vsel %vm1851, %v1838, %v1841
    %v1860 = vsel %vm1854, %v1847, 920167782
    %v1861 = vsel %vm1853, %v1844, %v1860
    %v1862 = vsel %vm1852, %v1859, %v1861
    %v1863 = vsel %vm1851, %v1841, %v1844
    %v1864 = vsel %vm1854, %v1850, 1326507024
    %v1865 = vsel %vm1853, %v1847, %v1864
    %v1866 = vsel %vm1852, %v1863, %v1865
    %v1867 = vshll.u32 %v1827, 8
    %v1868 = vand.u32 %v1867, 65535
    %v1869 = vshrl.u32 %v1867, 16
    %v1870 = vand.u32 %v1866, 65535
    %v1871 = vshrl.u32 %v1866, 16
    %v1872 = vmul.u32 %v1868, %v1870
    %v1873 = vmul.u32 %v1868, %v1871
    %v1874 = vmul.u32 %v1869, %v1870
    %v1875 = vmul.u32 %v1869, %v1871
    %v1876 = vshll.u32 %v1873, 16
    %v1877 = vshrl.u32 %v1873, 16
    %v1878 = vshll.u32 %v1874, 16
    %v1879 = vshrl.u32 %v1874, 16
    %vm1880 = vc.u32 %v1872, %v1876
    %v1881 = vsel %vm1880, 1, 0
    %v1882 = vadd.s32 %v1872, %v1876
    %v1883 = vadd.s32 %v1875, %v1881
    %vm1884 = vc.u32 %v1882, %v1878
    %v1885 = vsel %vm1884, 1, 0
    %v1886 = vadd.s32 %v1882, %v1878
    %v1887 = vadd.s32 %v1883, %v1885
    %v1888 = vadd.s32 %v1887, %v1877
    %v1889 = vadd.s32 %v1888, %v1879
    %v1890 = vand.u32 %v1867, 65535
    %v1891 = vshrl.u32 %v1867, 16
    %v1892 = vand.u32 %v1862, 65535
    %v1893 = vshrl.u32 %v1862, 16
    %v1894 = vmul.u32 %v1890, %v1892
    %v1895 = vmul.u32 %v1890, %v1893
    %v1896 = vmul.u32 %v1891, %v1892
    %v1897 = vmul.u32 %v1891, %v1893
    %v1898 = vshll.u32 %v1895, 16
    %v1899 = vshrl.u32 %v1895, 16
    %v1900 = vshll.u32 %v1896, 16
    %v1901 = vshrl.u32 %v1896, 16
    %vm1902 = vc.u32 %v1894, %v1898
    %v1903 = vsel %vm1902, 1, 0
    %v1904 = vadd.s32 %v1894, %v1898
    %v1905 = vadd.s32 %v1897, %v1903
    %vm1906 = vc.u32 %v1904, %v1900
    %v1907 = vsel %vm1906, 1, 0
    %v1908 = vadd.s32 %v1904, %v1900
    %v1909 = vadd.s32 %v1905, %v1907
    %v1910 = vadd.s32 %v1909, %v1899
    %v1911 = vadd.s32 %v1910, %v1901
    %v1912 = vmul.u32 %v1867, %v1858
    %v1913 = vadd.s32 %v1889, %v1908
    %vm1914 = vc.u32 %v1889, %v1908
    %v1915 = vadd.s32 %v1911, 1
    %v1916 = vsel %vm1914, %v1915, %v1911
    %v1917 = vadd.s32 %v1912, %v1916
    %v1918 = vadd.s32 %v1917, 536870912
    %v1919 = vshrl.u32 %v1918, 30
    %v1920 = vshll.u32 %v1919, 30
    %v1921 = vsub.s32 %v1917, %v1920
    %vm1922 = vcmp.lt.s32.totalorder %v1921, 0
    %v1923 = vsub.s32 0, %v1921
    %v1924 = vsel %vm1922, %v1923, %v1921
    %v1925 = vclz %v1924
    %v1926 = vsub.s32 %v1925, 2
    %vm1927 = vcmp.gt.s32.totalorder 0, %v1926
    %v1928 = vsel %vm1927, 0, %v1926
    %v1929 = vsub.s32 32, %v1928
    %v1930 = vshll.u32 %v1921, %v1928
    %v1931 = vshrl.u32 %v1913, %v1929
    %v1932 = vor.u32 %v1930, %v1931
    %v1933 = vsub.s32 4294967266, %v1928
    %v1934 = vadd.s32 %v1933, 127
    %v1935 = vshll.u32 %v1934, 23
    %v1936 = vor.u32 4788187, %v1935
    %v1937 = vand.u32 2147483647, %v1936
    %v1939 = vcvt.s32.f32 %v1932
    %v1940 = vmul.f32 %v1939, %v1937
    %v1941 = vxor.u32 %v1940, 2147483648
    %v1942 = vsel %vm1821, %v1941, %v1940
    %v1943 = vsub.s32 4, %v1919
    %v1944 = vsel %vm1821, %v1943, %v1919
    %v1945 = vsel %vm1820, %v427, %v1942
    %v1946 = vsel %vm1820, 0, %v1944
    %v1947 = vmul.f32 %v1945, %v1945
    %v1948 = vmul.f32 %v1947, -0.001358992
    %v1949 = vadd.f32 %v1948, 0.041655596
    %v1950 = vmul.f32 %v1947, %v1949
    %v1951 = vadd.f32 %v1950, -0.4999988
    %v1952 = vmul.f32 %v1947, %v1951
    %v1953 = vadd.f32 1.0, %v1952
    %v1954 = vmul.f32 %v1945, %v1945
    %v1955 = vmul.f32 %v1954, -0.00019511016
    %v1956 = vadd.f32 %v1955, 0.008332121
    %v1957 = vmul.f32 %v1954, %v1956
    %v1958 = vadd.f32 %v1957, -0.16666654
    %v1959 = vmul.f32 %v1954, %v1958
    %v1960 = vadd.f32 %v1959, 1.0
    %v1961 = vmul.f32 %v1960, %v1945
    %vm1962 = vweird.f32 %v427
    %v1963 = vand.u32 %v1946, 3
    %vm1964 = vcmp.lt.s32.totalorder %v1963, 2
    %vm1965 = vcmp.eq.s32.totalorder %v1963, 0
    %v1966 = vxor.u32 %v1961, 2147483648
    %v1967 = vsel %vm1965, %v1953, %v1966
    %vm1968 = vcmp.eq.s32.totalorder %v1963, 2
    %v1969 = vxor.u32 %v1953, 2147483648
    %v1970 = vsel %vm1968, %v1969, %v1961
    %v1971 = vsel %vm1964, %v1967, %v1970
    %v1972 = vsel %vm1962, nan, %v1971
    %vm1973 = vcmp.lt.f32.partialorder %v111, 7.0
    %v1979 = vrot.slane %v737, 7
    %v1980 = vrot.slane %v892, 6
    %v1981 = vrot.slane %v1047, 5
    %v1982 = vrot.slane %v1202, 4
    %vm1983 = vcmask 1040384
    %v1984 = vsel %vm1983, %v582, %v1979
    %vm1985 = vcmask 1041408
    %v1986 = vsel %vm1985, %v1984, %v1980
    %vm1987 = vcmask 1043459
    %v1988 = vsel %vm1987, %v1981, %v1982
    %vm1989 = vcmask 1042432
    %v1990 = vsel %vm1989, %v1986, %v1988
    %v1997 = vrot.slane %v1510, 7
    %v1998 = vrot.slane %v1664, 6
    %v1999 = vrot.slane %v1818, 5
    %v2000 = vrot.slane %v1972, 4
    %v2001 = vsel %vm1983, %v1356, %v1997
    %v2002 = vsel %vm1985, %v2001, %v1998
    %v2003 = vsel %vm1987, %v1999, %v2000
    %v2004 = vsel %vm1989, %v2002, %v2003
    %v2006 = vsel %vm1973, %v1990, %v2004
    %vm2007 = vcmp.lt.f32.partialorder %v111, 1.0
    %v2013 = vrot.slane %v408, 7
    %v2014 = vrot.slane %v409, 6
    %v2015 = vrot.slane %v410, 5
    %v2016 = vrot.slane %v411, 4
    %v2017 = vsel %vm1983, %v407, %v2013
    %v2018 = vsel %vm1985, %v2017, %v2014
    %v2019 = vsel %vm1987, %v2015, %v2016
    %v2020 = vsel %vm1989, %v2018, %v2019
    %v2022 = vsel %vm2007, %v2020, %v2006
    %v2023 = vld [vmem:[#allocation5] sm:$0x1]
    %v2025 = vand.u32 %v2023, 4294901760
    %v2027 = vsub.f32 %v2023, %v2025
    %v2029 = vand.u32 %v2027, 4294901760
    %v2031 = vsub.f32 %v2027, %v2029
    %v2032 = vpack.c.bf16 %v2025, %v2025
    %v2033 = vpack.c.bf16 %v2029, %v2029
    %v2034 = vpack.c.bf16 %v2031, %v2031
    %v2036 = vsel %vm202, %v2033, 0
    %2038 = vmatpush.bf16.msra.mxu0 0
    %2039 = vmatpush.bf16.msra.mxu0 0
    %2040 = vmatpush.bf16.msra.mxu0 0
    %2041 = vmatpush.bf16.msra.mxu0 0
    %2042 = vmatpush.bf16.msra.mxu0 0
    %2043 = vmatpush.bf16.msra.mxu0 %v182
    %2044 = vmatpush.bf16.msra.mxu0 %v177
    %2045 = vmatpush.bf16.msra.mxu0 %v172
    %2046 = vmatmul.bf16.gmra.mxu0 %v2036
    %v2047 = vpop.f32.mrf.mxu0
    %v2048 = vadd.f32 0.0, %v2047
    %v2049 = vpop.f32.mrf.mxu0
    %2050 = vdwg.mxu0
    %2051 = vmatpush.bf16.msra.mxu0 0
    %2052 = vmatpush.bf16.msra.mxu0 0
    %2053 = vmatpush.bf16.msra.mxu0 0
    %2054 = vmatpush.bf16.msra.mxu0 0
    %2055 = vmatpush.bf16.msra.mxu0 0
    %2056 = vmatpush.bf16.msra.mxu0 %v183
    %2057 = vmatpush.bf16.msra.mxu0 %v178
    %2058 = vmatpush.bf16.msra.mxu0 %v173
    %2059 = vmatmul.bf16.gmra.mxu0 %v2036
    %v2060 = vpop.f32.mrf.mxu0
    %v2061 = vadd.f32 0.0, %v2060
    %v2062 = vpop.f32.mrf.mxu0
    %2063 = vdwg.mxu0
    %2064 = vmatpush.bf16.msra.mxu0 0
    %2065 = vmatpush.bf16.msra.mxu0 0
    %2066 = vmatpush.bf16.msra.mxu0 0
    %2067 = vmatpush.bf16.msra.mxu0 0
    %2068 = vmatpush.bf16.msra.mxu0 0
    %2069 = vmatpush.bf16.msra.mxu0 %v184
    %2070 = vmatpush.bf16.msra.mxu0 %v179
    %2071 = vmatpush.bf16.msra.mxu0 %v174
    %2072 = vmatmul.bf16.gmra.mxu0 %v2036
    %v2073 = vpop.f32.mrf.mxu0
    %v2074 = vadd.f32 0.0, %v2073
    %v2075 = vpop.f32.mrf.mxu0
    %2076 = vdwg.mxu0
    %2077 = vmatpush.bf16.msra.mxu0 0
    %2078 = vmatpush.bf16.msra.mxu0 0
    %2079 = vmatpush.bf16.msra.mxu0 0
    %2080 = vmatpush.bf16.msra.mxu0 0
    %2081 = vmatpush.bf16.msra.mxu0 0
    %2082 = vmatpush.bf16.msra.mxu0 %v185
    %2083 = vmatpush.bf16.msra.mxu0 %v180
    %2084 = vmatpush.bf16.msra.mxu0 %v175
    %2085 = vmatmul.bf16.gmra.mxu0 %v2036
    %v2086 = vpop.f32.mrf.mxu0
    %v2087 = vadd.f32 0.0, %v2086
    %v2088 = vpop.f32.mrf.mxu0
    %2089 = vdwg.mxu0
    %2090 = vmatpush.bf16.msra.mxu0 0
    %2091 = vmatpush.bf16.msra.mxu0 0
    %2092 = vmatpush.bf16.msra.mxu0 0
    %2093 = vmatpush.bf16.msra.mxu0 0
    %2094 = vmatpush.bf16.msra.mxu0 0
    %2095 = vmatpush.bf16.msra.mxu0 %v186
    %2096 = vmatpush.bf16.msra.mxu0 %v181
    %2097 = vmatpush.bf16.msra.mxu0 %v176
    %2098 = vmatmul.bf16.gmra.mxu0 %v2036
    %v2099 = vpop.f32.mrf.mxu0
    %v2100 = vadd.f32 0.0, %v2099
    %v2101 = vpop.f32.mrf.mxu0
    %2102 = vdwg.mxu0
    %v2104 = vsel %vm202, %v2032, 0
    %2106 = vmatpush.bf16.msra.mxu0 0
    %2107 = vmatpush.bf16.msra.mxu0 0
    %2108 = vmatpush.bf16.msra.mxu0 0
    %2109 = vmatpush.bf16.msra.mxu0 0
    %2110 = vmatpush.bf16.msra.mxu0 0
    %2111 = vmatpush.bf16.msra.mxu0 %v182
    %2112 = vmatpush.bf16.msra.mxu0 %v177
    %2113 = vmatpush.bf16.msra.mxu0 %v172
    %2114 = vmatmul.bf16.gmra.mxu0 %v2104
    %v2115 = vpop.f32.mrf.mxu0
    %v2116 = vadd.f32 %v2048, %v2115
    %v2117 = vpop.f32.mrf.mxu0
    %2118 = vdwg.mxu0
    %2119 = vmatpush.bf16.msra.mxu0 0
    %2120 = vmatpush.bf16.msra.mxu0 0
    %2121 = vmatpush.bf16.msra.mxu0 0
    %2122 = vmatpush.bf16.msra.mxu0 0
    %2123 = vmatpush.bf16.msra.mxu0 0
    %2124 = vmatpush.bf16.msra.mxu0 %v183
    %2125 = vmatpush.bf16.msra.mxu0 %v178
    %2126 = vmatpush.bf16.msra.mxu0 %v173
    %2127 = vmatmul.bf16.gmra.mxu0 %v2104
    %v2128 = vpop.f32.mrf.mxu0
    %v2129 = vadd.f32 %v2061, %v2128
    %v2130 = vpop.f32.mrf.mxu0
    %2131 = vdwg.mxu0
    %2132 = vmatpush.bf16.msra.mxu0 0
    %2133 = vmatpush.bf16.msra.mxu0 0
    %2134 = vmatpush.bf16.msra.mxu0 0
    %2135 = vmatpush.bf16.msra.mxu0 0
    %2136 = vmatpush.bf16.msra.mxu0 0
    %2137 = vmatpush.bf16.msra.mxu0 %v184
    %2138 = vmatpush.bf16.msra.mxu0 %v179
    %2139 = vmatpush.bf16.msra.mxu0 %v174
    %2140 = vmatmul.bf16.gmra.mxu0 %v2104
    %v2141 = vpop.f32.mrf.mxu0
    %v2142 = vadd.f32 %v2074, %v2141
    %v2143 = vpop.f32.mrf.mxu0
    %2144 = vdwg.mxu0
    %2145 = vmatpush.bf16.msra.mxu0 0
    %2146 = vmatpush.bf16.msra.mxu0 0
    %2147 = vmatpush.bf16.msra.mxu0 0
    %2148 = vmatpush.bf16.msra.mxu0 0
    %2149 = vmatpush.bf16.msra.mxu0 0
    %2150 = vmatpush.bf16.msra.mxu0 %v185
    %2151 = vmatpush.bf16.msra.mxu0 %v180
    %2152 = vmatpush.bf16.msra.mxu0 %v175
    %2153 = vmatmul.bf16.gmra.mxu0 %v2104
    %v2154 = vpop.f32.mrf.mxu0
    %v2155 = vadd.f32 %v2087, %v2154
    %v2156 = vpop.f32.mrf.mxu0
    %2157 = vdwg.mxu0
    %2158 = vmatpush.bf16.msra.mxu0 0
    %2159 = vmatpush.bf16.msra.mxu0 0
    %2160 = vmatpush.bf16.msra.mxu0 0
    %2161 = vmatpush.bf16.msra.mxu0 0
    %2162 = vmatpush.bf16.msra.mxu0 0
    %2163 = vmatpush.bf16.msra.mxu0 %v186
    %2164 = vmatpush.bf16.msra.mxu0 %v181
    %2165 = vmatpush.bf16.msra.mxu0 %v176
    %2166 = vmatmul.bf16.gmra.mxu0 %v2104
    %v2167 = vpop.f32.mrf.mxu0
    %v2168 = vadd.f32 %v2100, %v2167
    %v2169 = vpop.f32.mrf.mxu0
    %2170 = vdwg.mxu0
    %v2172 = vsel %vm202, %v2034, 0
    %2174 = vmatpush.bf16.msra.mxu0 0
    %2175 = vmatpush.bf16.msra.mxu0 0
    %2176 = vmatpush.bf16.msra.mxu0 0
    %2177 = vmatpush.bf16.msra.mxu0 0
    %2178 = vmatpush.bf16.msra.mxu0 0
    %2179 = vmatpush.bf16.msra.mxu0 %v182
    %2180 = vmatpush.bf16.msra.mxu0 %v177
    %2181 = vmatpush.bf16.msra.mxu0 %v172
    %2182 = vmatmul.bf16.gmra.mxu0 %v2172
    %v2183 = vpop.f32.mrf.mxu0
    %v2184 = vadd.f32 0.0, %v2183
    %v2185 = vpop.f32.mrf.mxu0
    %2186 = vdwg.mxu0
    %2187 = vmatpush.bf16.msra.mxu0 0
    %2188 = vmatpush.bf16.msra.mxu0 0
    %2189 = vmatpush.bf16.msra.mxu0 0
    %2190 = vmatpush.bf16.msra.mxu0 0
    %2191 = vmatpush.bf16.msra.mxu0 0
    %2192 = vmatpush.bf16.msra.mxu0 %v183
    %2193 = vmatpush.bf16.msra.mxu0 %v178
    %2194 = vmatpush.bf16.msra.mxu0 %v173
    %2195 = vmatmul.bf16.gmra.mxu0 %v2172
    %v2196 = vpop.f32.mrf.mxu0
    %v2197 = vadd.f32 0.0, %v2196
    %v2198 = vpop.f32.mrf.mxu0
    %2199 = vdwg.mxu0
    %2200 = vmatpush.bf16.msra.mxu0 0
    %2201 = vmatpush.bf16.msra.mxu0 0
    %2202 = vmatpush.bf16.msra.mxu0 0
    %2203 = vmatpush.bf16.msra.mxu0 0
    %2204 = vmatpush.bf16.msra.mxu0 0
    %2205 = vmatpush.bf16.msra.mxu0 %v184
    %2206 = vmatpush.bf16.msra.mxu0 %v179
    %2207 = vmatpush.bf16.msra.mxu0 %v174
    %2208 = vmatmul.bf16.gmra.mxu0 %v2172
    %v2209 = vpop.f32.mrf.mxu0
    %v2210 = vadd.f32 0.0, %v2209
    %v2211 = vpop.f32.mrf.mxu0
    %2212 = vdwg.mxu0
    %2213 = vmatpush.bf16.msra.mxu0 0
    %2214 = vmatpush.bf16.msra.mxu0 0
    %2215 = vmatpush.bf16.msra.mxu0 0
    %2216 = vmatpush.bf16.msra.mxu0 0
    %2217 = vmatpush.bf16.msra.mxu0 0
    %2218 = vmatpush.bf16.msra.mxu0 %v185
    %2219 = vmatpush.bf16.msra.mxu0 %v180
    %2220 = vmatpush.bf16.msra.mxu0 %v175
    %2221 = vmatmul.bf16.gmra.mxu0 %v2172
    %v2222 = vpop.f32.mrf.mxu0
    %v2223 = vadd.f32 0.0, %v2222
    %v2224 = vpop.f32.mrf.mxu0
    %2225 = vdwg.mxu0
    %2226 = vmatpush.bf16.msra.mxu0 0
    %2227 = vmatpush.bf16.msra.mxu0 0
    %2228 = vmatpush.bf16.msra.mxu0 0
    %2229 = vmatpush.bf16.msra.mxu0 0
    %2230 = vmatpush.bf16.msra.mxu0 0
    %2231 = vmatpush.bf16.msra.mxu0 %v186
    %2232 = vmatpush.bf16.msra.mxu0 %v181
    %2233 = vmatpush.bf16.msra.mxu0 %v176
    %2234 = vmatmul.bf16.gmra.mxu0 %v2172
    %v2235 = vpop.f32.mrf.mxu0
    %v2236 = vadd.f32 0.0, %v2235
    %v2237 = vpop.f32.mrf.mxu0
    %2238 = vdwg.mxu0
    %v2239 = vadd.f32 %v2116, %v2184
    %v2240 = vadd.f32 %v2129, %v2197
    %v2241 = vadd.f32 %v2142, %v2210
    %v2242 = vadd.f32 %v2155, %v2223
    %v2243 = vadd.f32 %v2168, %v2236
    %v2249 = vrot.slane %v2240, 7
    %v2250 = vrot.slane %v2241, 6
    %v2251 = vrot.slane %v2242, 5
    %v2252 = vrot.slane %v2243, 4
    %v2253 = vsel %vm1983, %v2239, %v2249
    %v2254 = vsel %vm1985, %v2253, %v2250
    %v2255 = vsel %vm1987, %v2251, %v2252
    %v2256 = vsel %vm1989, %v2254, %v2255
    %v2258 = vmul.f32 %v2022, %v2256
    %v2259 = vlaneseq
    %vm2260 = vcmp.ge.s32.totalorder %v2259, 0
    %vm2261 = vcmp.lt.s32.totalorder %v2259, 624
    %vm2262 = vmand %vm2260, %vm2261
    %2263 = vst.msk [vmem:[#allocation11] sm:$0x1f] %vm2262, %v2258
    // Predicated region
    $region42: #{tpu_custom_call.1} parent=1 // pred_check
      _
    $region43: #{tpu_custom_call.1} parent=1 // pred_check_branch
      %2265 = sbr.rel (0) target = $region45
    $region44: #{tpu_custom_call.1} parent=1 // pred_region
      %2267 = vsyncadd [#allocation4], 0
      %s2269 = sshll.u32 [#allocation11], 4
      %s2270 = int_to_ptr.vmem [resolvable:$true] %s2269
      %s2271 = sshll.u32 %s5, 4
      %s2272 = int_to_ptr.hbm [resolvable:$true] %s2271
      %2274 = dma.vmem_to_hbm [thread:$0]  %s2270, 80, %s2272, [#allocation4]
    $region45: #{tpu_custom_call.1} parent=1 // pred_fallthru
      _
    // Predicated region
    $region46: #{tpu_custom_call.1} parent=1 // pred_check
      _
    $region47: #{tpu_custom_call.1} parent=1 // pred_check_branch
      %2276 = sbr.rel (0) target = $region49
    $region48: #{tpu_custom_call.1} parent=1 // pred_region
      %2278 = dma.done [#allocation4], 80
    $region49: #{tpu_custom_call.1} parent=1 // pred_fallthru
      _
    %2279 = vsyncpa [#allocation3], 1
    %2280 = vsyncpa [#allocation6], 1
    %2281 = vsyncpa [#allocation9], 1
    %2282 = vsyncpa [#allocation4], 1

</llo_original>
